<compile_context>
chip_gen: v5e
topology: v5e:2x2
jax: 0.10.0
libtpu: 0.0.40
codegen_flags: <defaults>
</compile_context>

<pallas_src>
import math

import jax
import jax.numpy as jnp
from jax import lax
from jax.experimental import pallas as pl
from jax.experimental.pallas import tpu as pltpu

A_PAD = 128  # lane-dense padded width of the action output


def _policy_lstm_kernel(
    x_ref, h0_ref, c0_ref,
    w1_ref, b1_ref, w2_ref, b2_ref,
    wx_ref, wh_ref, bg_ref,
    w3f_ref, w3l_ref, b3_ref, w4_ref, b4_ref,
    y_ref, hn_ref, cn_ref,
    zx_sc, fc3_sc, hall_sc,
):
    T, TB, SA = x_ref.shape
    H = h0_ref.shape[-1]
    R = T * TB

    # ---- Phase 1: h-independent matmuls, batched over all T*TB rows ----
    x2 = x_ref[...].reshape(R, SA)
    fc = jnp.maximum(
        jnp.dot(x2, w1_ref[...], preferred_element_type=jnp.float32)
        + b1_ref[...], 0.0)
    xl = jnp.maximum(
        jnp.dot(x2, w2_ref[...], preferred_element_type=jnp.float32)
        + b2_ref[...], 0.0)
    # fc contribution to linear3 (bias folded in), staged for the epilogue.
    fc3_sc[...] = (jnp.dot(fc, w3f_ref[...], preferred_element_type=jnp.float32)
                   + b3_ref[...]).reshape(T, TB, H)
    # Fused input-side gate pre-activations (i|f|g|o), gate biases folded in.
    zx_sc[...] = (jnp.dot(xl, wx_ref[...], preferred_element_type=jnp.float32)
                  + bg_ref[...]).reshape(T, TB, 4 * H)

    # ---- Phase 2: serial recurrence; only h@Wh + gates on the critical path ----
    wh = wh_ref[...]  # keep the recurrent weight hot in vregs

    def step(t, carry):
        h, c = carry
        z = zx_sc[t] + jnp.dot(h, wh, preferred_element_type=jnp.float32)
        z_i = z[:, 0 * H:1 * H]
        z_f = z[:, 1 * H:2 * H]
        z_g = z[:, 2 * H:3 * H]
        z_o = z[:, 3 * H:4 * H]
        # sigmoid(x) = 0.5*(tanh(0.5x)+1): single EUP op, no exp + divide.
        i_g = 0.5 * jnp.tanh(0.5 * z_i) + 0.5
        f_g = 0.5 * jnp.tanh(0.5 * z_f) + 0.5
        o_g = 0.5 * jnp.tanh(0.5 * z_o) + 0.5
        g_g = jnp.tanh(z_g)
        c_new = f_g * c + i_g * g_g
        h_new = o_g * jnp.tanh(c_new)
        hall_sc[t] = h_new
        return (h_new, c_new)

    carry = (h0_ref[...], c0_ref[...])
    if T <= 32:
        # Short rollouts: fully unroll so the scheduler sees across iterations.
        for t in range(T):
            carry = step(t, carry)
    else:
        carry = lax.fori_loop(0, T, step, carry)
    h_fin, c_fin = carry
    hn_ref[...] = h_fin
    cn_ref[...] = c_fin

    # ---- Phase 3: batched epilogue; one lane-dense (T*TB, A_PAD) store ----
    h_all = hall_sc[...].reshape(R, H)
    m = jnp.maximum(
        fc3_sc[...].reshape(R, H)
        + jnp.dot(h_all, w3l_ref[...], preferred_element_type=jnp.float32),
        0.0)
    y = jnp.tanh(jnp.dot(m, w4_ref[...], preferred_element_type=jnp.float32)
                 + b4_ref[...])
    y_ref[...] = y.reshape(T, TB, y_ref.shape[-1])


def _plan(B, T, SA, H):
    """Pick the batch tile (multiple of 8 sublanes) and a VMEM limit, both
    aware of the chip's VMEM capacity and of every kernel buffer."""
    try:
        vmem_cap = int(pltpu.get_tpu_info().vmem_capacity_bytes)
    except Exception:
        vmem_cap = 64 << 20  # conservative fallback (v7x per-TC size)

    # Resident weights (assume double-buffered even with constant index_maps).
    weight_elems = (2 * SA * H + 2 * H * 4 * H + 2 * H * H + H * A_PAD
                    + 2 * H + 4 * H + H + A_PAD)
    weight_bytes = 2 * 4 * weight_elems

    # Bytes that scale with each batch-tile row (f32 everywhere).
    per_row = 4 * (2 * T * SA        # x block (double-buffered)
                   + 2 * T * A_PAD   # y block (double-buffered)
                   + 2 * 4 * H       # h0/c0/hn/cn blocks
                   + T * 4 * H       # zx scratch
                   + 2 * T * H)      # fc3 + h_all scratch

    budget = max(vmem_cap // 2, 8 << 20)
    avail = max(budget - weight_bytes, 8 * per_row)
    tb = int(min(256, avail // per_row))
    tb = max(8, (tb // 8) * 8)

    if B > 8:
        # Keep >=2 grid steps so the "parallel" axis can shard across the two
        # TensorCores on v7x.
        half = -(-B // 2)
        half = -(-half // 8) * 8
        tb = min(tb, half)
    tb = min(tb, max(8, -(-B // 8) * 8))  # never larger than the padded batch

    need = weight_bytes + tb * per_row + (4 << 20)
    vmem_limit = int(min(int(0.9 * vmem_cap), max(2 * need, 32 << 20)))
    return tb, vmem_limit


def dpg_policy_lstm_forward(state, last_action, hidden_in, params):
    """state: (B, T, S); last_action: (B, T, A); hidden_in: ((1,B,H), (1,B,H))."""
    h0, c0 = hidden_in
    B, T, S = state.shape
    A = last_action.shape[-1]
    H = params["w1"].shape[1]
    SA = S + A

    # Fused [state | last_action] input stream, time-major (matches the
    # module's permute(1, 0, 2)); all math in f32.
    xs = jnp.concatenate([state, last_action], axis=-1).astype(jnp.float32)
    xs = jnp.swapaxes(xs, 0, 1)                       # (T, B, S+A)
    h0 = jnp.reshape(h0, (B, H)).astype(jnp.float32)
    c0 = jnp.reshape(c0, (B, H)).astype(jnp.float32)

    # Fused / lane-padded weights.
    w1p = jnp.zeros((SA, H), jnp.float32).at[:S, :].set(
        params["w1"].astype(jnp.float32))                       # acts only on state
    w4p = jnp.zeros((H, A_PAD), jnp.float32).at[:, :A].set(
        params["w4"].astype(jnp.float32))
    b4p = jnp.zeros((1, A_PAD), jnp.float32).at[:, :A].set(
        params["b4"].astype(jnp.float32))

    TB, vmem_limit = _plan(B, T, SA, H)
    Bp = -(-B // TB) * TB
    if Bp != B:
        pad = Bp - B
        xs = jnp.pad(xs, ((0, 0), (0, pad), (0, 0)))
        h0 = jnp.pad(h0, ((0, pad), (0, 0)))
        c0 = jnp.pad(c0, ((0, pad), (0, 0)))
    nb = Bp // TB

    time_b = lambda shape: pl.BlockSpec(shape, lambda i: (0, i, 0))
    row_b = lambda shape: pl.BlockSpec(shape, lambda i: (i, 0))
    full = lambda arr: pl.BlockSpec(arr.shape, lambda i: (0, 0))

    wts = [w1p, params["b1"], params["w2"], params["b2"],
           params["wx"], params["wh"], params["bg"],
           params["w3f"], params["w3l"], params["b3"], w4p, b4p]
    wts = [w.astype(jnp.float32) for w in wts]

    in_specs = ([time_b((T, TB, SA)), row_b((TB, H)), row_b((TB, H))]
                + [full(w) for w in wts])
    out_specs = (time_b((T, TB, A_PAD)), row_b((TB, H)), row_b((TB, H)))
    out_shape = (jax.ShapeDtypeStruct((T, Bp, A_PAD), jnp.float32),
                 jax.ShapeDtypeStruct((Bp, H), jnp.float32),
                 jax.ShapeDtypeStruct((Bp, H), jnp.float32))

    scratch = [pltpu.VMEM((T, TB, 4 * H), jnp.float32),   # zx (gate pre-acts)
               pltpu.VMEM((T, TB, H), jnp.float32),       # fc @ w3f + b3
               pltpu.VMEM((T, TB, H), jnp.float32)]       # per-step h

    per_row_step = 4 * SA * H + 20 * H * H + 2 * H * A_PAD
    cost = pl.CostEstimate(
        flops=int(Bp * T * per_row_step),
        transcendentals=int(Bp * T * (5 * H + A_PAD)),
        bytes_accessed=int(4 * (Bp * T * (SA + A_PAD) + 4 * Bp * H
                                + sum(math.prod(w.shape) for w in wts))),
    )

    y_pad, hn, cn = pl.pallas_call(
        _policy_lstm_kernel,
        grid=(nb,),
        in_specs=in_specs,
        out_specs=out_specs,
        out_shape=out_shape,
        scratch_shapes=scratch,
        compiler_params=pltpu.CompilerParams(
            dimension_semantics=("parallel",),
            vmem_limit_bytes=vmem_limit),
        cost_estimate=cost,
    )(xs, h0, c0, *wts)

    # Slice the real action lanes first, then restore (B, T, A) order.
    y = jnp.swapaxes(y_pad[:, :B, :A], 0, 1)
    hidden_out = (hn[:B][None, ...], cn[:B][None, ...])
    return y, hidden_out


def init_params(key, state_dim, action_dim, hidden_dim, init_w=3e-3):
    """PyTorch-style init; weights stored transposed (in, out); LSTM gate
    weights fused along the output dim as (H, 4H) in gate order (i, f, g, o)."""
    ks = jax.random.split(key, 12)
    H = hidden_dim

    def lin(kw, kb, fan_in, fan_out):
        bound = 1.0 / math.sqrt(fan_in)
        w = jax.random.uniform(kw, (fan_in, fan_out), jnp.float32, -bound, bound)
        b = jax.random.uniform(kb, (1, fan_out), jnp.float32, -bound, bound)
        return w, b

    w1, b1 = lin(ks[0], ks[1], state_dim, H)
    w2, b2 = lin(ks[2], ks[3], state_dim + action_dim, H)

    bl = 1.0 / math.sqrt(H)
    wx = jax.random.uniform(ks[4], (H, 4 * H), jnp.float32, -bl, bl)
    wh = jax.random.uniform(ks[5], (H, 4 * H), jnp.float32, -bl, bl)
    b_ih = jax.random.uniform(ks[6], (1, 4 * H), jnp.float32, -bl, bl)
    b_hh = jax.random.uniform(ks[7], (1, 4 * H), jnp.float32, -bl, bl)
    bg = b_ih + b_hh

    w3, b3 = lin(ks[8], ks[9], 2 * H, H)
    w3f, w3l = w3[:H], w3[H:]

    w4 = jax.random.uniform(ks[10], (H, action_dim), jnp.float32, -init_w, init_w)
    b4 = jax.random.uniform(ks[11], (1, action_dim), jnp.float32, -init_w, init_w)

    return dict(w1=w1, b1=b1, w2=w2, b2=b2, wx=wx, wh=wh, bg=bg,
                w3f=w3f, w3l=w3l, b3=b3, w4=w4, b4=b4)


def reference_forward(state, last_action, hidden_in, params):
    """Pure-JAX reference with identical semantics (correctness check)."""
    h0, c0 = hidden_in
    B, T, S = state.shape
    H = params["w1"].shape[1]
    st = jnp.swapaxes(state, 0, 1)
    at = jnp.swapaxes(last_action, 0, 1)
    xs = jnp.concatenate([st, at], axis=-1)

    fc = jax.nn.relu(jnp.einsum("tbs,sh->tbh", st, params["w1"]) + params["b1"])
    xl = jax.nn.relu(jnp.einsum("tbk,kh->tbh", xs, params["w2"]) + params["b2"])

    wx, wh, bg = params["wx"], params["wh"], params["bg"]

    def step(carry, x_t):
        h, c = carry
        z = x_t @ wx + h @ wh + bg
        i = jax.nn.sigmoid(z[:, :H])
        f = jax.nn.sigmoid(z[:, H:2 * H])
        g = jnp.tanh(z[:, 2 * H:3 * H])
        o = jax.nn.sigmoid(z[:, 3 * H:])
        c2 = f * c + i * g
        h2 = o * jnp.tanh(c2)
        return (h2, c2), h2

    (h_t, c_t), hs = lax.scan(
        step, (jnp.reshape(h0, (B, H)), jnp.reshape(c0, (B, H))), xl)

    m = jax.nn.relu(jnp.einsum("tbh,hk->tbk", fc, params["w3f"])
                    + jnp.einsum("tbh,hk->tbk", hs, params["w3l"]) + params["b3"])
    y = jnp.tanh(jnp.einsum("tbh,ha->tba", m, params["w4"]) + params["b4"])
    return jnp.swapaxes(y, 0, 1), (h_t[None, ...], c_t[None, ...])


if __name__ == "__main__":
    # Small shapes consistent with the module: vector state/action, short rollout.
    batch, seq = 2, 8
    state_dim, action_dim, hidden_dim = 16, 8, 32

    key = jax.random.PRNGKey(0)
    kp, ks, ka, kh, kc = jax.random.split(key, 5)
    params = init_params(kp, state_dim, action_dim, hidden_dim)
    state = jax.random.normal(ks, (batch, seq, state_dim), jnp.float32)
    last_action = jax.random.uniform(ka, (batch, seq, action_dim), jnp.float32, -1.0, 1.0)
    h0 = jax.random.normal(kh, (1, batch, hidden_dim), jnp.float32)
    c0 = jax.random.normal(kc, (1, batch, hidden_dim), jnp.float32)

    # TODO(synk): the Gaussian exploration noise + action_range scaling live in
    # evaluate()/get_action(), outside forward(); they stay in plain JAX.
    action, (hn, cn) = dpg_policy_lstm_forward(state, last_action, (h0, c0), params)
    action = jax.block_until_ready(action)

    ref_action, (ref_hn, ref_cn) = reference_forward(state, last_action, (h0, c0), params)

    assert action.shape == (batch, seq, action_dim)
    assert hn.shape == (1, batch, hidden_dim) and cn.shape == (1, batch, hidden_dim)
    assert jnp.allclose(action, ref_action, atol=2e-4, rtol=2e-4)
    assert jnp.allclose(hn, ref_hn, atol=2e-4, rtol=2e-4)
    assert jnp.allclose(cn, ref_cn, atol=2e-4, rtol=2e-4)

    print("KERNEL_OK")
</pallas_src>

<mosaic_0001>
module attributes {stable_mosaic.version = 11 : i64} {
  func.func @_policy_lstm_kernel(%arg0: i32, %arg1: memref<8x8x24xf32, #tpu.memory_space<vmem>>, %arg2: memref<8x32xf32, #tpu.memory_space<vmem>>, %arg3: memref<8x32xf32, #tpu.memory_space<vmem>>, %arg4: memref<24x32xf32, #tpu.memory_space<vmem>>, %arg5: memref<1x32xf32, #tpu.memory_space<vmem>>, %arg6: memref<24x32xf32, #tpu.memory_space<vmem>>, %arg7: memref<1x32xf32, #tpu.memory_space<vmem>>, %arg8: memref<32x128xf32, #tpu.memory_space<vmem>>, %arg9: memref<32x128xf32, #tpu.memory_space<vmem>>, %arg10: memref<1x128xf32, #tpu.memory_space<vmem>>, %arg11: memref<32x32xf32, #tpu.memory_space<vmem>>, %arg12: memref<32x32xf32, #tpu.memory_space<vmem>>, %arg13: memref<1x32xf32, #tpu.memory_space<vmem>>, %arg14: memref<32x128xf32, #tpu.memory_space<vmem>>, %arg15: memref<1x128xf32, #tpu.memory_space<vmem>>, %arg16: memref<8x8x128xf32, #tpu.memory_space<vmem>>, %arg17: memref<8x32xf32, #tpu.memory_space<vmem>>, %arg18: memref<8x32xf32, #tpu.memory_space<vmem>>, %arg19: memref<8x8x128xf32, #tpu.memory_space<vmem>>, %arg20: memref<8x8x32xf32, #tpu.memory_space<vmem>>, %arg21: memref<8x8x32xf32, #tpu.memory_space<vmem>>) attributes {dimension_semantics = [#tpu.dimension_semantics<parallel>], iteration_bounds = array<i64: 1>, scalar_prefetch = 0 : i64, scratch_operands = 3 : i64, tpu.core_type = #tpu.core_type<tc>, window_params = [{transform_indices = @transform_0, window_bounds = array<i64: 8, 8, 24>}, {transform_indices = @transform_1, window_bounds = array<i64: 8, 32>}, {transform_indices = @transform_2, window_bounds = array<i64: 8, 32>}, {pipeline_mode = #tpu.pipeline_mode<synchronous>, transform_indices = @transform_3, window_bounds = array<i64: 24, 32>}, {pipeline_mode = #tpu.pipeline_mode<synchronous>, transform_indices = @transform_4, window_bounds = array<i64: 1, 32>}, {pipeline_mode = #tpu.pipeline_mode<synchronous>, transform_indices = @transform_5, window_bounds = array<i64: 24, 32>}, {pipeline_mode = #tpu.pipeline_mode<synchronous>, transform_indices = @transform_6, window_bounds = array<i64: 1, 32>}, {pipeline_mode = #tpu.pipeline_mode<synchronous>, transform_indices = @transform_7, window_bounds = array<i64: 32, 128>}, {pipeline_mode = #tpu.pipeline_mode<synchronous>, transform_indices = @transform_8, window_bounds = array<i64: 32, 128>}, {pipeline_mode = #tpu.pipeline_mode<synchronous>, transform_indices = @transform_9, window_bounds = array<i64: 1, 128>}, {pipeline_mode = #tpu.pipeline_mode<synchronous>, transform_indices = @transform_10, window_bounds = array<i64: 32, 32>}, {pipeline_mode = #tpu.pipeline_mode<synchronous>, transform_indices = @transform_11, window_bounds = array<i64: 32, 32>}, {pipeline_mode = #tpu.pipeline_mode<synchronous>, transform_indices = @transform_12, window_bounds = array<i64: 1, 32>}, {pipeline_mode = #tpu.pipeline_mode<synchronous>, transform_indices = @transform_13, window_bounds = array<i64: 32, 128>}, {pipeline_mode = #tpu.pipeline_mode<synchronous>, transform_indices = @transform_14, window_bounds = array<i64: 1, 128>}, {transform_indices = @transform_15, window_bounds = array<i64: 8, 8, 128>}, {transform_indices = @transform_16, window_bounds = array<i64: 8, 32>}, {transform_indices = @transform_17, window_bounds = array<i64: 8, 32>}]} {
    %c0 = arith.constant 0 : index
    %c0_0 = arith.constant 0 : index
    %c0_1 = arith.constant 0 : index
    %0 = vector.load %arg1[%c0, %c0_0, %c0_1] : memref<8x8x24xf32, #tpu.memory_space<vmem>>, vector<8x8x24xf32>
    %1 = vector.shape_cast %0 : vector<8x8x24xf32> to vector<64x24xf32>
    %c0_2 = arith.constant 0 : index
    %c0_3 = arith.constant 0 : index
    %2 = vector.load %arg4[%c0_2, %c0_3] : memref<24x32xf32, #tpu.memory_space<vmem>>, vector<24x32xf32>
    %cst = arith.constant dense<0.000000e+00> : vector<64x32xf32>
    %3 = tpu.matmul %1, %2, %cst {dimension_numbers = #tpu.dot_dimension_numbers<[1], [0], [0], [1], [0, 0, 1, 1], [], []>} : vector<64x24xf32>, vector<24x32xf32>, vector<64x32xf32> -> vector<64x32xf32>
    %c0_4 = arith.constant 0 : index
    %c0_5 = arith.constant 0 : index
    %4 = vector.load %arg5[%c0_4, %c0_5] : memref<1x32xf32, #tpu.memory_space<vmem>>, vector<1x32xf32>
    %5 = vector.broadcast %4 : vector<1x32xf32> to vector<64x32xf32>
    %6 = arith.addf %3, %5 : vector<64x32xf32>
    %cst_6 = arith.constant 0.000000e+00 : f32
    %7 = vector.broadcast %cst_6 : f32 to vector<64x32xf32>
    %8 = arith.maximumf %6, %7 : vector<64x32xf32>
    %c0_7 = arith.constant 0 : index
    %c0_8 = arith.constant 0 : index
    %9 = vector.load %arg6[%c0_7, %c0_8] : memref<24x32xf32, #tpu.memory_space<vmem>>, vector<24x32xf32>
    %cst_9 = arith.constant dense<0.000000e+00> : vector<64x32xf32>
    %10 = tpu.matmul %1, %9, %cst_9 {dimension_numbers = #tpu.dot_dimension_numbers<[1], [0], [0], [1], [0, 0, 1, 1], [], []>} : vector<64x24xf32>, vector<24x32xf32>, vector<64x32xf32> -> vector<64x32xf32>
    %c0_10 = arith.constant 0 : index
    %c0_11 = arith.constant 0 : index
    %11 = vector.load %arg7[%c0_10, %c0_11] : memref<1x32xf32, #tpu.memory_space<vmem>>, vector<1x32xf32>
    %12 = vector.broadcast %11 : vector<1x32xf32> to vector<64x32xf32>
    %13 = arith.addf %10, %12 : vector<64x32xf32>
    %cst_12 = arith.constant 0.000000e+00 : f32
    %14 = vector.broadcast %cst_12 : f32 to vector<64x32xf32>
    %15 = arith.maximumf %13, %14 : vector<64x32xf32>
    %c0_13 = arith.constant 0 : index
    %c0_14 = arith.constant 0 : index
    %16 = vector.load %arg11[%c0_13, %c0_14] : memref<32x32xf32, #tpu.memory_space<vmem>>, vector<32x32xf32>
    %cst_15 = arith.constant dense<0.000000e+00> : vector<64x32xf32>
    %17 = tpu.matmul %8, %16, %cst_15 {dimension_numbers = #tpu.dot_dimension_numbers<[1], [0], [0], [1], [0, 0, 1, 1], [], []>} : vector<64x32xf32>, vector<32x32xf32>, vector<64x32xf32> -> vector<64x32xf32>
    %c0_16 = arith.constant 0 : index
    %c0_17 = arith.constant 0 : index
    %18 = vector.load %arg13[%c0_16, %c0_17] : memref<1x32xf32, #tpu.memory_space<vmem>>, vector<1x32xf32>
    %19 = vector.broadcast %18 : vector<1x32xf32> to vector<64x32xf32>
    %20 = arith.addf %17, %19 : vector<64x32xf32>
    %21 = vector.shape_cast %20 : vector<64x32xf32> to vector<8x8x32xf32>
    %c0_18 = arith.constant 0 : index
    %c0_19 = arith.constant 0 : index
    %c0_20 = arith.constant 0 : index
    %22 = vector.load %arg20[%c0_18, %c0_19, %c0_20] : memref<8x8x32xf32, #tpu.memory_space<vmem>>, vector<8x8x32xf32>
    tpu.vector_store %arg20[%c0_18, %c0_19, %c0_20], %21 {strides = array<i32>} : memref<8x8x32xf32, #tpu.memory_space<vmem>>, vector<8x8x32xf32>,
    %c0_21 = arith.constant 0 : index
    %c0_22 = arith.constant 0 : index
    %23 = vector.load %arg8[%c0_21, %c0_22] : memref<32x128xf32, #tpu.memory_space<vmem>>, vector<32x128xf32>
    %cst_23 = arith.constant dense<0.000000e+00> : vector<64x128xf32>
    %24 = tpu.matmul %15, %23, %cst_23 {dimension_numbers = #tpu.dot_dimension_numbers<[1], [0], [0], [1], [0, 0, 1, 1], [], []>} : vector<64x32xf32>, vector<32x128xf32>, vector<64x128xf32> -> vector<64x128xf32>
    %c0_24 = arith.constant 0 : index
    %c0_25 = arith.constant 0 : index
    %25 = vector.load %arg10[%c0_24, %c0_25] : memref<1x128xf32, #tpu.memory_space<vmem>>, vector<1x128xf32>
    %26 = vector.broadcast %25 : vector<1x128xf32> to vector<64x128xf32>
    %27 = arith.addf %24, %26 : vector<64x128xf32>
    %28 = vector.shape_cast %27 : vector<64x128xf32> to vector<8x8x128xf32>
    %c0_26 = arith.constant 0 : index
    %c0_27 = arith.constant 0 : index
    %c0_28 = arith.constant 0 : index
    %29 = vector.load %arg19[%c0_26, %c0_27, %c0_28] : memref<8x8x128xf32, #tpu.memory_space<vmem>>, vector<8x8x128xf32>
    tpu.vector_store %arg19[%c0_26, %c0_27, %c0_28], %28 {strides = array<i32>} : memref<8x8x128xf32, #tpu.memory_space<vmem>>, vector<8x8x128xf32>,
    %c0_29 = arith.constant 0 : index
    %c0_30 = arith.constant 0 : index
    %30 = vector.load %arg9[%c0_29, %c0_30] : memref<32x128xf32, #tpu.memory_space<vmem>>, vector<32x128xf32>
    %c0_31 = arith.constant 0 : index
    %c0_32 = arith.constant 0 : index
    %31 = vector.load %arg2[%c0_31, %c0_32] : memref<8x32xf32, #tpu.memory_space<vmem>>, vector<8x32xf32>
    %c0_33 = arith.constant 0 : index
    %c0_34 = arith.constant 0 : index
    %32 = vector.load %arg3[%c0_33, %c0_34] : memref<8x32xf32, #tpu.memory_space<vmem>>, vector<8x32xf32>
    %c0_35 = arith.constant 0 : index
    %c0_36 = arith.constant 0 : index
    %c0_37 = arith.constant 0 : index
    %33 = vector.load %arg19[%c0_35, %c0_36, %c0_37] : memref<8x8x128xf32, #tpu.memory_space<vmem>>, vector<1x8x128xf32>
    %34 = vector.shape_cast %33 : vector<1x8x128xf32> to vector<8x128xf32>
    %cst_38 = arith.constant dense<0.000000e+00> : vector<8x128xf32>
    %35 = tpu.matmul %31, %30, %cst_38 {dimension_numbers = #tpu.dot_dimension_numbers<[1], [0], [0], [1], [0, 0, 1, 1], [], []>} : vector<8x32xf32>, vector<32x128xf32>, vector<8x128xf32> -> vector<8x128xf32>
    %36 = arith.addf %34, %35 : vector<8x128xf32>
    %37 = vector.extract_strided_slice %36 {offsets = [0, 0], sizes = [8, 32], strides = [1, 1]} : vector<8x128xf32> to vector<8x32xf32>
    %38 = vector.extract_strided_slice %36 {offsets = [0, 32], sizes = [8, 32], strides = [1, 1]} : vector<8x128xf32> to vector<8x32xf32>
    %39 = vector.extract_strided_slice %36 {offsets = [0, 64], sizes = [8, 32], strides = [1, 1]} : vector<8x128xf32> to vector<8x32xf32>
    %40 = vector.extract_strided_slice %36 {offsets = [0, 96], sizes = [8, 32], strides = [1, 1]} : vector<8x128xf32> to vector<8x32xf32>
    %cst_39 = arith.constant 5.000000e-01 : f32
    %41 = vector.broadcast %cst_39 : f32 to vector<8x32xf32>
    %42 = arith.mulf %41, %37 : vector<8x32xf32>
    %43 = math.tanh %42 : vector<8x32xf32>
    %cst_40 = arith.constant 5.000000e-01 : f32
    %44 = vector.broadcast %cst_40 : f32 to vector<8x32xf32>
    %45 = arith.mulf %44, %43 : vector<8x32xf32>
    %cst_41 = arith.constant 5.000000e-01 : f32
    %46 = vector.broadcast %cst_41 : f32 to vector<8x32xf32>
    %47 = arith.addf %45, %46 : vector<8x32xf32>
    %cst_42 = arith.constant 5.000000e-01 : f32
    %48 = vector.broadcast %cst_42 : f32 to vector<8x32xf32>
    %49 = arith.mulf %48, %38 : vector<8x32xf32>
    %50 = math.tanh %49 : vector<8x32xf32>
    %cst_43 = arith.constant 5.000000e-01 : f32
    %51 = vector.broadcast %cst_43 : f32 to vector<8x32xf32>
    %52 = arith.mulf %51, %50 : vector<8x32xf32>
    %cst_44 = arith.constant 5.000000e-01 : f32
    %53 = vector.broadcast %cst_44 : f32 to vector<8x32xf32>
    %54 = arith.addf %52, %53 : vector<8x32xf32>
    %cst_45 = arith.constant 5.000000e-01 : f32
    %55 = vector.broadcast %cst_45 : f32 to vector<8x32xf32>
    %56 = arith.mulf %55, %40 : vector<8x32xf32>
    %57 = math.tanh %56 : vector<8x32xf32>
    %cst_46 = arith.constant 5.000000e-01 : f32
    %58 = vector.broadcast %cst_46 : f32 to vector<8x32xf32>
    %59 = arith.mulf %58, %57 : vector<8x32xf32>
    %cst_47 = arith.constant 5.000000e-01 : f32
    %60 = vector.broadcast %cst_47 : f32 to vector<8x32xf32>
    %61 = arith.addf %59, %60 : vector<8x32xf32>
    %62 = math.tanh %39 : vector<8x32xf32>
    %63 = arith.mulf %54, %32 : vector<8x32xf32>
    %64 = arith.mulf %47, %62 : vector<8x32xf32>
    %65 = arith.addf %63, %64 : vector<8x32xf32>
    %66 = math.tanh %65 : vector<8x32xf32>
    %67 = arith.mulf %61, %66 : vector<8x32xf32>
    %c0_48 = arith.constant 0 : index
    %c0_49 = arith.constant 0 : index
    %c0_50 = arith.constant 0 : index
    %68 = vector.load %arg21[%c0_48, %c0_49, %c0_50] : memref<8x8x32xf32, #tpu.memory_space<vmem>>, vector<1x8x32xf32>
    %69 = vector.shape_cast %68 : vector<1x8x32xf32> to vector<8x32xf32>
    %70 = vector.shape_cast %67 : vector<8x32xf32> to vector<1x8x32xf32>
    tpu.vector_store %arg21[%c0_48, %c0_49, %c0_50], %70 {strides = array<i32>} : memref<8x8x32xf32, #tpu.memory_space<vmem>>, vector<1x8x32xf32>,
    %c1 = arith.constant 1 : index
    %c0_51 = arith.constant 0 : index
    %c0_52 = arith.constant 0 : index
    %71 = vector.load %arg19[%c1, %c0_51, %c0_52] : memref<8x8x128xf32, #tpu.memory_space<vmem>>, vector<1x8x128xf32>
    %72 = vector.shape_cast %71 : vector<1x8x128xf32> to vector<8x128xf32>
    %cst_53 = arith.constant dense<0.000000e+00> : vector<8x128xf32>
    %73 = tpu.matmul %67, %30, %cst_53 {dimension_numbers = #tpu.dot_dimension_numbers<[1], [0], [0], [1], [0, 0, 1, 1], [], []>} : vector<8x32xf32>, vector<32x128xf32>, vector<8x128xf32> -> vector<8x128xf32>
    %74 = arith.addf %72, %73 : vector<8x128xf32>
    %75 = vector.extract_strided_slice %74 {offsets = [0, 0], sizes = [8, 32], strides = [1, 1]} : vector<8x128xf32> to vector<8x32xf32>
    %76 = vector.extract_strided_slice %74 {offsets = [0, 32], sizes = [8, 32], strides = [1, 1]} : vector<8x128xf32> to vector<8x32xf32>
    %77 = vector.extract_strided_slice %74 {offsets = [0, 64], sizes = [8, 32], strides = [1, 1]} : vector<8x128xf32> to vector<8x32xf32>
    %78 = vector.extract_strided_slice %74 {offsets = [0, 96], sizes = [8, 32], strides = [1, 1]} : vector<8x128xf32> to vector<8x32xf32>
    %cst_54 = arith.constant 5.000000e-01 : f32
    %79 = vector.broadcast %cst_54 : f32 to vector<8x32xf32>
    %80 = arith.mulf %79, %75 : vector<8x32xf32>
    %81 = math.tanh %80 : vector<8x32xf32>
    %cst_55 = arith.constant 5.000000e-01 : f32
    %82 = vector.broadcast %cst_55 : f32 to vector<8x32xf32>
    %83 = arith.mulf %82, %81 : vector<8x32xf32>
    %cst_56 = arith.constant 5.000000e-01 : f32
    %84 = vector.broadcast %cst_56 : f32 to vector<8x32xf32>
    %85 = arith.addf %83, %84 : vector<8x32xf32>
    %cst_57 = arith.constant 5.000000e-01 : f32
    %86 = vector.broadcast %cst_57 : f32 to vector<8x32xf32>
    %87 = arith.mulf %86, %76 : vector<8x32xf32>
    %88 = math.tanh %87 : vector<8x32xf32>
    %cst_58 = arith.constant 5.000000e-01 : f32
    %89 = vector.broadcast %cst_58 : f32 to vector<8x32xf32>
    %90 = arith.mulf %89, %88 : vector<8x32xf32>
    %cst_59 = arith.constant 5.000000e-01 : f32
    %91 = vector.broadcast %cst_59 : f32 to vector<8x32xf32>
    %92 = arith.addf %90, %91 : vector<8x32xf32>
    %cst_60 = arith.constant 5.000000e-01 : f32
    %93 = vector.broadcast %cst_60 : f32 to vector<8x32xf32>
    %94 = arith.mulf %93, %78 : vector<8x32xf32>
    %95 = math.tanh %94 : vector<8x32xf32>
    %cst_61 = arith.constant 5.000000e-01 : f32
    %96 = vector.broadcast %cst_61 : f32 to vector<8x32xf32>
    %97 = arith.mulf %96, %95 : vector<8x32xf32>
    %cst_62 = arith.constant 5.000000e-01 : f32
    %98 = vector.broadcast %cst_62 : f32 to vector<8x32xf32>
    %99 = arith.addf %97, %98 : vector<8x32xf32>
    %100 = math.tanh %77 : vector<8x32xf32>
    %101 = arith.mulf %92, %65 : vector<8x32xf32>
    %102 = arith.mulf %85, %100 : vector<8x32xf32>
    %103 = arith.addf %101, %102 : vector<8x32xf32>
    %104 = math.tanh %103 : vector<8x32xf32>
    %105 = arith.mulf %99, %104 : vector<8x32xf32>
    %c1_63 = arith.constant 1 : index
    %c0_64 = arith.constant 0 : index
    %c0_65 = arith.constant 0 : index
    %106 = vector.load %arg21[%c1_63, %c0_64, %c0_65] : memref<8x8x32xf32, #tpu.memory_space<vmem>>, vector<1x8x32xf32>
    %107 = vector.shape_cast %106 : vector<1x8x32xf32> to vector<8x32xf32>
    %108 = vector.shape_cast %105 : vector<8x32xf32> to vector<1x8x32xf32>
    tpu.vector_store %arg21[%c1_63, %c0_64, %c0_65], %108 {strides = array<i32>} : memref<8x8x32xf32, #tpu.memory_space<vmem>>, vector<1x8x32xf32>,
    %c2 = arith.constant 2 : index
    %c0_66 = arith.constant 0 : index
    %c0_67 = arith.constant 0 : index
    %109 = vector.load %arg19[%c2, %c0_66, %c0_67] : memref<8x8x128xf32, #tpu.memory_space<vmem>>, vector<1x8x128xf32>
    %110 = vector.shape_cast %109 : vector<1x8x128xf32> to vector<8x128xf32>
    %cst_68 = arith.constant dense<0.000000e+00> : vector<8x128xf32>
    %111 = tpu.matmul %105, %30, %cst_68 {dimension_numbers = #tpu.dot_dimension_numbers<[1], [0], [0], [1], [0, 0, 1, 1], [], []>} : vector<8x32xf32>, vector<32x128xf32>, vector<8x128xf32> -> vector<8x128xf32>
    %112 = arith.addf %110, %111 : vector<8x128xf32>
    %113 = vector.extract_strided_slice %112 {offsets = [0, 0], sizes = [8, 32], strides = [1, 1]} : vector<8x128xf32> to vector<8x32xf32>
    %114 = vector.extract_strided_slice %112 {offsets = [0, 32], sizes = [8, 32], strides = [1, 1]} : vector<8x128xf32> to vector<8x32xf32>
    %115 = vector.extract_strided_slice %112 {offsets = [0, 64], sizes = [8, 32], strides = [1, 1]} : vector<8x128xf32> to vector<8x32xf32>
    %116 = vector.extract_strided_slice %112 {offsets = [0, 96], sizes = [8, 32], strides = [1, 1]} : vector<8x128xf32> to vector<8x32xf32>
    %cst_69 = arith.constant 5.000000e-01 : f32
    %117 = vector.broadcast %cst_69 : f32 to vector<8x32xf32>
    %118 = arith.mulf %117, %113 : vector<8x32xf32>
    %119 = math.tanh %118 : vector<8x32xf32>
    %cst_70 = arith.constant 5.000000e-01 : f32
    %120 = vector.broadcast %cst_70 : f32 to vector<8x32xf32>
    %121 = arith.mulf %120, %119 : vector<8x32xf32>
    %cst_71 = arith.constant 5.000000e-01 : f32
    %122 = vector.broadcast %cst_71 : f32 to vector<8x32xf32>
    %123 = arith.addf %121, %122 : vector<8x32xf32>
    %cst_72 = arith.constant 5.000000e-01 : f32
    %124 = vector.broadcast %cst_72 : f32 to vector<8x32xf32>
    %125 = arith.mulf %124, %114 : vector<8x32xf32>
    %126 = math.tanh %125 : vector<8x32xf32>
    %cst_73 = arith.constant 5.000000e-01 : f32
    %127 = vector.broadcast %cst_73 : f32 to vector<8x32xf32>
    %128 = arith.mulf %127, %126 : vector<8x32xf32>
    %cst_74 = arith.constant 5.000000e-01 : f32
    %129 = vector.broadcast %cst_74 : f32 to vector<8x32xf32>
    %130 = arith.addf %128, %129 : vector<8x32xf32>
    %cst_75 = arith.constant 5.000000e-01 : f32
    %131 = vector.broadcast %cst_75 : f32 to vector<8x32xf32>
    %132 = arith.mulf %131, %116 : vector<8x32xf32>
    %133 = math.tanh %132 : vector<8x32xf32>
    %cst_76 = arith.constant 5.000000e-01 : f32
    %134 = vector.broadcast %cst_76 : f32 to vector<8x32xf32>
    %135 = arith.mulf %134, %133 : vector<8x32xf32>
    %cst_77 = arith.constant 5.000000e-01 : f32
    %136 = vector.broadcast %cst_77 : f32 to vector<8x32xf32>
    %137 = arith.addf %135, %136 : vector<8x32xf32>
    %138 = math.tanh %115 : vector<8x32xf32>
    %139 = arith.mulf %130, %103 : vector<8x32xf32>
    %140 = arith.mulf %123, %138 : vector<8x32xf32>
    %141 = arith.addf %139, %140 : vector<8x32xf32>
    %142 = math.tanh %141 : vector<8x32xf32>
    %143 = arith.mulf %137, %142 : vector<8x32xf32>
    %c2_78 = arith.constant 2 : index
    %c0_79 = arith.constant 0 : index
    %c0_80 = arith.constant 0 : index
    %144 = vector.load %arg21[%c2_78, %c0_79, %c0_80] : memref<8x8x32xf32, #tpu.memory_space<vmem>>, vector<1x8x32xf32>
    %145 = vector.shape_cast %144 : vector<1x8x32xf32> to vector<8x32xf32>
    %146 = vector.shape_cast %143 : vector<8x32xf32> to vector<1x8x32xf32>
    tpu.vector_store %arg21[%c2_78, %c0_79, %c0_80], %146 {strides = array<i32>} : memref<8x8x32xf32, #tpu.memory_space<vmem>>, vector<1x8x32xf32>,
    %c3 = arith.constant 3 : index
    %c0_81 = arith.constant 0 : index
    %c0_82 = arith.constant 0 : index
    %147 = vector.load %arg19[%c3, %c0_81, %c0_82] : memref<8x8x128xf32, #tpu.memory_space<vmem>>, vector<1x8x128xf32>
    %148 = vector.shape_cast %147 : vector<1x8x128xf32> to vector<8x128xf32>
    %cst_83 = arith.constant dense<0.000000e+00> : vector<8x128xf32>
    %149 = tpu.matmul %143, %30, %cst_83 {dimension_numbers = #tpu.dot_dimension_numbers<[1], [0], [0], [1], [0, 0, 1, 1], [], []>} : vector<8x32xf32>, vector<32x128xf32>, vector<8x128xf32> -> vector<8x128xf32>
    %150 = arith.addf %148, %149 : vector<8x128xf32>
    %151 = vector.extract_strided_slice %150 {offsets = [0, 0], sizes = [8, 32], strides = [1, 1]} : vector<8x128xf32> to vector<8x32xf32>
    %152 = vector.extract_strided_slice %150 {offsets = [0, 32], sizes = [8, 32], strides = [1, 1]} : vector<8x128xf32> to vector<8x32xf32>
    %153 = vector.extract_strided_slice %150 {offsets = [0, 64], sizes = [8, 32], strides = [1, 1]} : vector<8x128xf32> to vector<8x32xf32>
    %154 = vector.extract_strided_slice %150 {offsets = [0, 96], sizes = [8, 32], strides = [1, 1]} : vector<8x128xf32> to vector<8x32xf32>
    %cst_84 = arith.constant 5.000000e-01 : f32
    %155 = vector.broadcast %cst_84 : f32 to vector<8x32xf32>
    %156 = arith.mulf %155, %151 : vector<8x32xf32>
    %157 = math.tanh %156 : vector<8x32xf32>
    %cst_85 = arith.constant 5.000000e-01 : f32
    %158 = vector.broadcast %cst_85 : f32 to vector<8x32xf32>
    %159 = arith.mulf %158, %157 : vector<8x32xf32>
    %cst_86 = arith.constant 5.000000e-01 : f32
    %160 = vector.broadcast %cst_86 : f32 to vector<8x32xf32>
    %161 = arith.addf %159, %160 : vector<8x32xf32>
    %cst_87 = arith.constant 5.000000e-01 : f32
    %162 = vector.broadcast %cst_87 : f32 to vector<8x32xf32>
    %163 = arith.mulf %162, %152 : vector<8x32xf32>
    %164 = math.tanh %163 : vector<8x32xf32>
    %cst_88 = arith.constant 5.000000e-01 : f32
    %165 = vector.broadcast %cst_88 : f32 to vector<8x32xf32>
    %166 = arith.mulf %165, %164 : vector<8x32xf32>
    %cst_89 = arith.constant 5.000000e-01 : f32
    %167 = vector.broadcast %cst_89 : f32 to vector<8x32xf32>
    %168 = arith.addf %166, %167 : vector<8x32xf32>
    %cst_90 = arith.constant 5.000000e-01 : f32
    %169 = vector.broadcast %cst_90 : f32 to vector<8x32xf32>
    %170 = arith.mulf %169, %154 : vector<8x32xf32>
    %171 = math.tanh %170 : vector<8x32xf32>
    %cst_91 = arith.constant 5.000000e-01 : f32
    %172 = vector.broadcast %cst_91 : f32 to vector<8x32xf32>
    %173 = arith.mulf %172, %171 : vector<8x32xf32>
    %cst_92 = arith.constant 5.000000e-01 : f32
    %174 = vector.broadcast %cst_92 : f32 to vector<8x32xf32>
    %175 = arith.addf %173, %174 : vector<8x32xf32>
    %176 = math.tanh %153 : vector<8x32xf32>
    %177 = arith.mulf %168, %141 : vector<8x32xf32>
    %178 = arith.mulf %161, %176 : vector<8x32xf32>
    %179 = arith.addf %177, %178 : vector<8x32xf32>
    %180 = math.tanh %179 : vector<8x32xf32>
    %181 = arith.mulf %175, %180 : vector<8x32xf32>
    %c3_93 = arith.constant 3 : index
    %c0_94 = arith.constant 0 : index
    %c0_95 = arith.constant 0 : index
    %182 = vector.load %arg21[%c3_93, %c0_94, %c0_95] : memref<8x8x32xf32, #tpu.memory_space<vmem>>, vector<1x8x32xf32>
    %183 = vector.shape_cast %182 : vector<1x8x32xf32> to vector<8x32xf32>
    %184 = vector.shape_cast %181 : vector<8x32xf32> to vector<1x8x32xf32>
    tpu.vector_store %arg21[%c3_93, %c0_94, %c0_95], %184 {strides = array<i32>} : memref<8x8x32xf32, #tpu.memory_space<vmem>>, vector<1x8x32xf32>,
    %c4 = arith.constant 4 : index
    %c0_96 = arith.constant 0 : index
    %c0_97 = arith.constant 0 : index
    %185 = vector.load %arg19[%c4, %c0_96, %c0_97] : memref<8x8x128xf32, #tpu.memory_space<vmem>>, vector<1x8x128xf32>
    %186 = vector.shape_cast %185 : vector<1x8x128xf32> to vector<8x128xf32>
    %cst_98 = arith.constant dense<0.000000e+00> : vector<8x128xf32>
    %187 = tpu.matmul %181, %30, %cst_98 {dimension_numbers = #tpu.dot_dimension_numbers<[1], [0], [0], [1], [0, 0, 1, 1], [], []>} : vector<8x32xf32>, vector<32x128xf32>, vector<8x128xf32> -> vector<8x128xf32>
    %188 = arith.addf %186, %187 : vector<8x128xf32>
    %189 = vector.extract_strided_slice %188 {offsets = [0, 0], sizes = [8, 32], strides = [1, 1]} : vector<8x128xf32> to vector<8x32xf32>
    %190 = vector.extract_strided_slice %188 {offsets = [0, 32], sizes = [8, 32], strides = [1, 1]} : vector<8x128xf32> to vector<8x32xf32>
    %191 = vector.extract_strided_slice %188 {offsets = [0, 64], sizes = [8, 32], strides = [1, 1]} : vector<8x128xf32> to vector<8x32xf32>
    %192 = vector.extract_strided_slice %188 {offsets = [0, 96], sizes = [8, 32], strides = [1, 1]} : vector<8x128xf32> to vector<8x32xf32>
    %cst_99 = arith.constant 5.000000e-01 : f32
    %193 = vector.broadcast %cst_99 : f32 to vector<8x32xf32>
    %194 = arith.mulf %193, %189 : vector<8x32xf32>
    %195 = math.tanh %194 : vector<8x32xf32>
    %cst_100 = arith.constant 5.000000e-01 : f32
    %196 = vector.broadcast %cst_100 : f32 to vector<8x32xf32>
    %197 = arith.mulf %196, %195 : vector<8x32xf32>
    %cst_101 = arith.constant 5.000000e-01 : f32
    %198 = vector.broadcast %cst_101 : f32 to vector<8x32xf32>
    %199 = arith.addf %197, %198 : vector<8x32xf32>
    %cst_102 = arith.constant 5.000000e-01 : f32
    %200 = vector.broadcast %cst_102 : f32 to vector<8x32xf32>
    %201 = arith.mulf %200, %190 : vector<8x32xf32>
    %202 = math.tanh %201 : vector<8x32xf32>
    %cst_103 = arith.constant 5.000000e-01 : f32
    %203 = vector.broadcast %cst_103 : f32 to vector<8x32xf32>
    %204 = arith.mulf %203, %202 : vector<8x32xf32>
    %cst_104 = arith.constant 5.000000e-01 : f32
    %205 = vector.broadcast %cst_104 : f32 to vector<8x32xf32>
    %206 = arith.addf %204, %205 : vector<8x32xf32>
    %cst_105 = arith.constant 5.000000e-01 : f32
    %207 = vector.broadcast %cst_105 : f32 to vector<8x32xf32>
    %208 = arith.mulf %207, %192 : vector<8x32xf32>
    %209 = math.tanh %208 : vector<8x32xf32>
    %cst_106 = arith.constant 5.000000e-01 : f32
    %210 = vector.broadcast %cst_106 : f32 to vector<8x32xf32>
    %211 = arith.mulf %210, %209 : vector<8x32xf32>
    %cst_107 = arith.constant 5.000000e-01 : f32
    %212 = vector.broadcast %cst_107 : f32 to vector<8x32xf32>
    %213 = arith.addf %211, %212 : vector<8x32xf32>
    %214 = math.tanh %191 : vector<8x32xf32>
    %215 = arith.mulf %206, %179 : vector<8x32xf32>
    %216 = arith.mulf %199, %214 : vector<8x32xf32>
    %217 = arith.addf %215, %216 : vector<8x32xf32>
    %218 = math.tanh %217 : vector<8x32xf32>
    %219 = arith.mulf %213, %218 : vector<8x32xf32>
    %c4_108 = arith.constant 4 : index
    %c0_109 = arith.constant 0 : index
    %c0_110 = arith.constant 0 : index
    %220 = vector.load %arg21[%c4_108, %c0_109, %c0_110] : memref<8x8x32xf32, #tpu.memory_space<vmem>>, vector<1x8x32xf32>
    %221 = vector.shape_cast %220 : vector<1x8x32xf32> to vector<8x32xf32>
    %222 = vector.shape_cast %219 : vector<8x32xf32> to vector<1x8x32xf32>
    tpu.vector_store %arg21[%c4_108, %c0_109, %c0_110], %222 {strides = array<i32>} : memref<8x8x32xf32, #tpu.memory_space<vmem>>, vector<1x8x32xf32>,
    %c5 = arith.constant 5 : index
    %c0_111 = arith.constant 0 : index
    %c0_112 = arith.constant 0 : index
    %223 = vector.load %arg19[%c5, %c0_111, %c0_112] : memref<8x8x128xf32, #tpu.memory_space<vmem>>, vector<1x8x128xf32>
    %224 = vector.shape_cast %223 : vector<1x8x128xf32> to vector<8x128xf32>
    %cst_113 = arith.constant dense<0.000000e+00> : vector<8x128xf32>
    %225 = tpu.matmul %219, %30, %cst_113 {dimension_numbers = #tpu.dot_dimension_numbers<[1], [0], [0], [1], [0, 0, 1, 1], [], []>} : vector<8x32xf32>, vector<32x128xf32>, vector<8x128xf32> -> vector<8x128xf32>
    %226 = arith.addf %224, %225 : vector<8x128xf32>
    %227 = vector.extract_strided_slice %226 {offsets = [0, 0], sizes = [8, 32], strides = [1, 1]} : vector<8x128xf32> to vector<8x32xf32>
    %228 = vector.extract_strided_slice %226 {offsets = [0, 32], sizes = [8, 32], strides = [1, 1]} : vector<8x128xf32> to vector<8x32xf32>
    %229 = vector.extract_strided_slice %226 {offsets = [0, 64], sizes = [8, 32], strides = [1, 1]} : vector<8x128xf32> to vector<8x32xf32>
    %230 = vector.extract_strided_slice %226 {offsets = [0, 96], sizes = [8, 32], strides = [1, 1]} : vector<8x128xf32> to vector<8x32xf32>
    %cst_114 = arith.constant 5.000000e-01 : f32
    %231 = vector.broadcast %cst_114 : f32 to vector<8x32xf32>
    %232 = arith.mulf %231, %227 : vector<8x32xf32>
    %233 = math.tanh %232 : vector<8x32xf32>
    %cst_115 = arith.constant 5.000000e-01 : f32
    %234 = vector.broadcast %cst_115 : f32 to vector<8x32xf32>
    %235 = arith.mulf %234, %233 : vector<8x32xf32>
    %cst_116 = arith.constant 5.000000e-01 : f32
    %236 = vector.broadcast %cst_116 : f32 to vector<8x32xf32>
    %237 = arith.addf %235, %236 : vector<8x32xf32>
    %cst_117 = arith.constant 5.000000e-01 : f32
    %238 = vector.broadcast %cst_117 : f32 to vector<8x32xf32>
    %239 = arith.mulf %238, %228 : vector<8x32xf32>
    %240 = math.tanh %239 : vector<8x32xf32>
    %cst_118 = arith.constant 5.000000e-01 : f32
    %241 = vector.broadcast %cst_118 : f32 to vector<8x32xf32>
    %242 = arith.mulf %241, %240 : vector<8x32xf32>
    %cst_119 = arith.constant 5.000000e-01 : f32
    %243 = vector.broadcast %cst_119 : f32 to vector<8x32xf32>
    %244 = arith.addf %242, %243 : vector<8x32xf32>
    %cst_120 = arith.constant 5.000000e-01 : f32
    %245 = vector.broadcast %cst_120 : f32 to vector<8x32xf32>
    %246 = arith.mulf %245, %230 : vector<8x32xf32>
    %247 = math.tanh %246 : vector<8x32xf32>
    %cst_121 = arith.constant 5.000000e-01 : f32
    %248 = vector.broadcast %cst_121 : f32 to vector<8x32xf32>
    %249 = arith.mulf %248, %247 : vector<8x32xf32>
    %cst_122 = arith.constant 5.000000e-01 : f32
    %250 = vector.broadcast %cst_122 : f32 to vector<8x32xf32>
    %251 = arith.addf %249, %250 : vector<8x32xf32>
    %252 = math.tanh %229 : vector<8x32xf32>
    %253 = arith.mulf %244, %217 : vector<8x32xf32>
    %254 = arith.mulf %237, %252 : vector<8x32xf32>
    %255 = arith.addf %253, %254 : vector<8x32xf32>
    %256 = math.tanh %255 : vector<8x32xf32>
    %257 = arith.mulf %251, %256 : vector<8x32xf32>
    %c5_123 = arith.constant 5 : index
    %c0_124 = arith.constant 0 : index
    %c0_125 = arith.constant 0 : index
    %258 = vector.load %arg21[%c5_123, %c0_124, %c0_125] : memref<8x8x32xf32, #tpu.memory_space<vmem>>, vector<1x8x32xf32>
    %259 = vector.shape_cast %258 : vector<1x8x32xf32> to vector<8x32xf32>
    %260 = vector.shape_cast %257 : vector<8x32xf32> to vector<1x8x32xf32>
    tpu.vector_store %arg21[%c5_123, %c0_124, %c0_125], %260 {strides = array<i32>} : memref<8x8x32xf32, #tpu.memory_space<vmem>>, vector<1x8x32xf32>,
    %c6 = arith.constant 6 : index
    %c0_126 = arith.constant 0 : index
    %c0_127 = arith.constant 0 : index
    %261 = vector.load %arg19[%c6, %c0_126, %c0_127] : memref<8x8x128xf32, #tpu.memory_space<vmem>>, vector<1x8x128xf32>
    %262 = vector.shape_cast %261 : vector<1x8x128xf32> to vector<8x128xf32>
    %cst_128 = arith.constant dense<0.000000e+00> : vector<8x128xf32>
    %263 = tpu.matmul %257, %30, %cst_128 {dimension_numbers = #tpu.dot_dimension_numbers<[1], [0], [0], [1], [0, 0, 1, 1], [], []>} : vector<8x32xf32>, vector<32x128xf32>, vector<8x128xf32> -> vector<8x128xf32>
    %264 = arith.addf %262, %263 : vector<8x128xf32>
    %265 = vector.extract_strided_slice %264 {offsets = [0, 0], sizes = [8, 32], strides = [1, 1]} : vector<8x128xf32> to vector<8x32xf32>
    %266 = vector.extract_strided_slice %264 {offsets = [0, 32], sizes = [8, 32], strides = [1, 1]} : vector<8x128xf32> to vector<8x32xf32>
    %267 = vector.extract_strided_slice %264 {offsets = [0, 64], sizes = [8, 32], strides = [1, 1]} : vector<8x128xf32> to vector<8x32xf32>
    %268 = vector.extract_strided_slice %264 {offsets = [0, 96], sizes = [8, 32], strides = [1, 1]} : vector<8x128xf32> to vector<8x32xf32>
    %cst_129 = arith.constant 5.000000e-01 : f32
    %269 = vector.broadcast %cst_129 : f32 to vector<8x32xf32>
    %270 = arith.mulf %269, %265 : vector<8x32xf32>
    %271 = math.tanh %270 : vector<8x32xf32>
    %cst_130 = arith.constant 5.000000e-01 : f32
    %272 = vector.broadcast %cst_130 : f32 to vector<8x32xf32>
    %273 = arith.mulf %272, %271 : vector<8x32xf32>
    %cst_131 = arith.constant 5.000000e-01 : f32
    %274 = vector.broadcast %cst_131 : f32 to vector<8x32xf32>
    %275 = arith.addf %273, %274 : vector<8x32xf32>
    %cst_132 = arith.constant 5.000000e-01 : f32
    %276 = vector.broadcast %cst_132 : f32 to vector<8x32xf32>
    %277 = arith.mulf %276, %266 : vector<8x32xf32>
    %278 = math.tanh %277 : vector<8x32xf32>
    %cst_133 = arith.constant 5.000000e-01 : f32
    %279 = vector.broadcast %cst_133 : f32 to vector<8x32xf32>
    %280 = arith.mulf %279, %278 : vector<8x32xf32>
    %cst_134 = arith.constant 5.000000e-01 : f32
    %281 = vector.broadcast %cst_134 : f32 to vector<8x32xf32>
    %282 = arith.addf %280, %281 : vector<8x32xf32>
    %cst_135 = arith.constant 5.000000e-01 : f32
    %283 = vector.broadcast %cst_135 : f32 to vector<8x32xf32>
    %284 = arith.mulf %283, %268 : vector<8x32xf32>
    %285 = math.tanh %284 : vector<8x32xf32>
    %cst_136 = arith.constant 5.000000e-01 : f32
    %286 = vector.broadcast %cst_136 : f32 to vector<8x32xf32>
    %287 = arith.mulf %286, %285 : vector<8x32xf32>
    %cst_137 = arith.constant 5.000000e-01 : f32
    %288 = vector.broadcast %cst_137 : f32 to vector<8x32xf32>
    %289 = arith.addf %287, %288 : vector<8x32xf32>
    %290 = math.tanh %267 : vector<8x32xf32>
    %291 = arith.mulf %282, %255 : vector<8x32xf32>
    %292 = arith.mulf %275, %290 : vector<8x32xf32>
    %293 = arith.addf %291, %292 : vector<8x32xf32>
    %294 = math.tanh %293 : vector<8x32xf32>
    %295 = arith.mulf %289, %294 : vector<8x32xf32>
    %c6_138 = arith.constant 6 : index
    %c0_139 = arith.constant 0 : index
    %c0_140 = arith.constant 0 : index
    %296 = vector.load %arg21[%c6_138, %c0_139, %c0_140] : memref<8x8x32xf32, #tpu.memory_space<vmem>>, vector<1x8x32xf32>
    %297 = vector.shape_cast %296 : vector<1x8x32xf32> to vector<8x32xf32>
    %298 = vector.shape_cast %295 : vector<8x32xf32> to vector<1x8x32xf32>
    tpu.vector_store %arg21[%c6_138, %c0_139, %c0_140], %298 {strides = array<i32>} : memref<8x8x32xf32, #tpu.memory_space<vmem>>, vector<1x8x32xf32>,
    %c7 = arith.constant 7 : index
    %c0_141 = arith.constant 0 : index
    %c0_142 = arith.constant 0 : index
    %299 = vector.load %arg19[%c7, %c0_141, %c0_142] : memref<8x8x128xf32, #tpu.memory_space<vmem>>, vector<1x8x128xf32>
    %300 = vector.shape_cast %299 : vector<1x8x128xf32> to vector<8x128xf32>
    %cst_143 = arith.constant dense<0.000000e+00> : vector<8x128xf32>
    %301 = tpu.matmul %295, %30, %cst_143 {dimension_numbers = #tpu.dot_dimension_numbers<[1], [0], [0], [1], [0, 0, 1, 1], [], []>} : vector<8x32xf32>, vector<32x128xf32>, vector<8x128xf32> -> vector<8x128xf32>
    %302 = arith.addf %300, %301 : vector<8x128xf32>
    %303 = vector.extract_strided_slice %302 {offsets = [0, 0], sizes = [8, 32], strides = [1, 1]} : vector<8x128xf32> to vector<8x32xf32>
    %304 = vector.extract_strided_slice %302 {offsets = [0, 32], sizes = [8, 32], strides = [1, 1]} : vector<8x128xf32> to vector<8x32xf32>
    %305 = vector.extract_strided_slice %302 {offsets = [0, 64], sizes = [8, 32], strides = [1, 1]} : vector<8x128xf32> to vector<8x32xf32>
    %306 = vector.extract_strided_slice %302 {offsets = [0, 96], sizes = [8, 32], strides = [1, 1]} : vector<8x128xf32> to vector<8x32xf32>
    %cst_144 = arith.constant 5.000000e-01 : f32
    %307 = vector.broadcast %cst_144 : f32 to vector<8x32xf32>
    %308 = arith.mulf %307, %303 : vector<8x32xf32>
    %309 = math.tanh %308 : vector<8x32xf32>
    %cst_145 = arith.constant 5.000000e-01 : f32
    %310 = vector.broadcast %cst_145 : f32 to vector<8x32xf32>
    %311 = arith.mulf %310, %309 : vector<8x32xf32>
    %cst_146 = arith.constant 5.000000e-01 : f32
    %312 = vector.broadcast %cst_146 : f32 to vector<8x32xf32>
    %313 = arith.addf %311, %312 : vector<8x32xf32>
    %cst_147 = arith.constant 5.000000e-01 : f32
    %314 = vector.broadcast %cst_147 : f32 to vector<8x32xf32>
    %315 = arith.mulf %314, %304 : vector<8x32xf32>
    %316 = math.tanh %315 : vector<8x32xf32>
    %cst_148 = arith.constant 5.000000e-01 : f32
    %317 = vector.broadcast %cst_148 : f32 to vector<8x32xf32>
    %318 = arith.mulf %317, %316 : vector<8x32xf32>
    %cst_149 = arith.constant 5.000000e-01 : f32
    %319 = vector.broadcast %cst_149 : f32 to vector<8x32xf32>
    %320 = arith.addf %318, %319 : vector<8x32xf32>
    %cst_150 = arith.constant 5.000000e-01 : f32
    %321 = vector.broadcast %cst_150 : f32 to vector<8x32xf32>
    %322 = arith.mulf %321, %306 : vector<8x32xf32>
    %323 = math.tanh %322 : vector<8x32xf32>
    %cst_151 = arith.constant 5.000000e-01 : f32
    %324 = vector.broadcast %cst_151 : f32 to vector<8x32xf32>
    %325 = arith.mulf %324, %323 : vector<8x32xf32>
    %cst_152 = arith.constant 5.000000e-01 : f32
    %326 = vector.broadcast %cst_152 : f32 to vector<8x32xf32>
    %327 = arith.addf %325, %326 : vector<8x32xf32>
    %328 = math.tanh %305 : vector<8x32xf32>
    %329 = arith.mulf %320, %293 : vector<8x32xf32>
    %330 = arith.mulf %313, %328 : vector<8x32xf32>
    %331 = arith.addf %329, %330 : vector<8x32xf32>
    %332 = math.tanh %331 : vector<8x32xf32>
    %333 = arith.mulf %327, %332 : vector<8x32xf32>
    %c7_153 = arith.constant 7 : index
    %c0_154 = arith.constant 0 : index
    %c0_155 = arith.constant 0 : index
    %334 = vector.load %arg21[%c7_153, %c0_154, %c0_155] : memref<8x8x32xf32, #tpu.memory_space<vmem>>, vector<1x8x32xf32>
    %335 = vector.shape_cast %334 : vector<1x8x32xf32> to vector<8x32xf32>
    %336 = vector.shape_cast %333 : vector<8x32xf32> to vector<1x8x32xf32>
    tpu.vector_store %arg21[%c7_153, %c0_154, %c0_155], %336 {strides = array<i32>} : memref<8x8x32xf32, #tpu.memory_space<vmem>>, vector<1x8x32xf32>,
    %c0_156 = arith.constant 0 : index
    %c0_157 = arith.constant 0 : index
    %337 = vector.load %arg17[%c0_156, %c0_157] : memref<8x32xf32, #tpu.memory_space<vmem>>, vector<8x32xf32>
    tpu.vector_store %arg17[%c0_156, %c0_157], %333 {strides = array<i32>} : memref<8x32xf32, #tpu.memory_space<vmem>>, vector<8x32xf32>,
    %c0_158 = arith.constant 0 : index
    %c0_159 = arith.constant 0 : index
    %338 = vector.load %arg18[%c0_158, %c0_159] : memref<8x32xf32, #tpu.memory_space<vmem>>, vector<8x32xf32>
    tpu.vector_store %arg18[%c0_158, %c0_159], %331 {strides = array<i32>} : memref<8x32xf32, #tpu.memory_space<vmem>>, vector<8x32xf32>,
    %c0_160 = arith.constant 0 : index
    %c0_161 = arith.constant 0 : index
    %c0_162 = arith.constant 0 : index
    %339 = vector.load %arg21[%c0_160, %c0_161, %c0_162] : memref<8x8x32xf32, #tpu.memory_space<vmem>>, vector<8x8x32xf32>
    %340 = vector.shape_cast %339 : vector<8x8x32xf32> to vector<64x32xf32>
    %c0_163 = arith.constant 0 : index
    %c0_164 = arith.constant 0 : index
    %c0_165 = arith.constant 0 : index
    %341 = vector.load %arg20[%c0_163, %c0_164, %c0_165] : memref<8x8x32xf32, #tpu.memory_space<vmem>>, vector<8x8x32xf32>
    %342 = vector.shape_cast %341 : vector<8x8x32xf32> to vector<64x32xf32>
    %c0_166 = arith.constant 0 : index
    %c0_167 = arith.constant 0 : index
    %343 = vector.load %arg12[%c0_166, %c0_167] : memref<32x32xf32, #tpu.memory_space<vmem>>, vector<32x32xf32>
    %cst_168 = arith.constant dense<0.000000e+00> : vector<64x32xf32>
    %344 = tpu.matmul %340, %343, %cst_168 {dimension_numbers = #tpu.dot_dimension_numbers<[1], [0], [0], [1], [0, 0, 1, 1], [], []>} : vector<64x32xf32>, vector<32x32xf32>, vector<64x32xf32> -> vector<64x32xf32>
    %345 = arith.addf %342, %344 : vector<64x32xf32>
    %cst_169 = arith.constant 0.000000e+00 : f32
    %346 = vector.broadcast %cst_169 : f32 to vector<64x32xf32>
    %347 = arith.maximumf %345, %346 : vector<64x32xf32>
    %c0_170 = arith.constant 0 : index
    %c0_171 = arith.constant 0 : index
    %348 = vector.load %arg14[%c0_170, %c0_171] : memref<32x128xf32, #tpu.memory_space<vmem>>, vector<32x128xf32>
    %cst_172 = arith.constant dense<0.000000e+00> : vector<64x128xf32>
    %349 = tpu.matmul %347, %348, %cst_172 {dimension_numbers = #tpu.dot_dimension_numbers<[1], [0], [0], [1], [0, 0, 1, 1], [], []>} : vector<64x32xf32>, vector<32x128xf32>, vector<64x128xf32> -> vector<64x128xf32>
    %c0_173 = arith.constant 0 : index
    %c0_174 = arith.constant 0 : index
    %350 = vector.load %arg15[%c0_173, %c0_174] : memref<1x128xf32, #tpu.memory_space<vmem>>, vector<1x128xf32>
    %351 = vector.broadcast %350 : vector<1x128xf32> to vector<64x128xf32>
    %352 = arith.addf %349, %351 : vector<64x128xf32>
    %353 = math.tanh %352 : vector<64x128xf32>
    %354 = vector.shape_cast %353 : vector<64x128xf32> to vector<8x8x128xf32>
    %c0_175 = arith.constant 0 : index
    %c0_176 = arith.constant 0 : index
    %c0_177 = arith.constant 0 : index
    %355 = vector.load %arg16[%c0_175, %c0_176, %c0_177] : memref<8x8x128xf32, #tpu.memory_space<vmem>>, vector<8x8x128xf32>
    tpu.vector_store %arg16[%c0_175, %c0_176, %c0_177], %354 {strides = array<i32>} : memref<8x8x128xf32, #tpu.memory_space<vmem>>, vector<8x8x128xf32>,
    return
  }
  func.func @transform_0(%arg0: i32) -> (i32, i32, i32) {
    %c0_i32 = arith.constant 0 : i32
    %c0_i32_0 = arith.constant 0 : i32
    %c0_i32_1 = arith.constant 0 : i32
    return %c0_i32, %arg0, %c0_i32_0 : i32, i32, i32
  }
  func.func @transform_1(%arg0: i32) -> (i32, i32) {
    %c0_i32 = arith.constant 0 : i32
    %c0_i32_0 = arith.constant 0 : i32
    return %arg0, %c0_i32 : i32, i32
  }
  func.func @transform_2(%arg0: i32) -> (i32, i32) {
    %c0_i32 = arith.constant 0 : i32
    %c0_i32_0 = arith.constant 0 : i32
    return %arg0, %c0_i32 : i32, i32
  }
  func.func @transform_3(%arg0: i32) -> (i32, i32) {
    %c0_i32 = arith.constant 0 : i32
    %c0_i32_0 = arith.constant 0 : i32
    %c0_i32_1 = arith.constant 0 : i32
    return %c0_i32, %c0_i32_0 : i32, i32
  }
  func.func @transform_4(%arg0: i32) -> (i32, i32) {
    %c0_i32 = arith.constant 0 : i32
    %c0_i32_0 = arith.constant 0 : i32
    %c0_i32_1 = arith.constant 0 : i32
    return %c0_i32, %c0_i32_0 : i32, i32
  }
  func.func @transform_5(%arg0: i32) -> (i32, i32) {
    %c0_i32 = arith.constant 0 : i32
    %c0_i32_0 = arith.constant 0 : i32
    %c0_i32_1 = arith.constant 0 : i32
    return %c0_i32, %c0_i32_0 : i32, i32
  }
  func.func @transform_6(%arg0: i32) -> (i32, i32) {
    %c0_i32 = arith.constant 0 : i32
    %c0_i32_0 = arith.constant 0 : i32
    %c0_i32_1 = arith.constant 0 : i32
    return %c0_i32, %c0_i32_0 : i32, i32
  }
  func.func @transform_7(%arg0: i32) -> (i32, i32) {
    %c0_i32 = arith.constant 0 : i32
    %c0_i32_0 = arith.constant 0 : i32
    %c0_i32_1 = arith.constant 0 : i32
    return %c0_i32, %c0_i32_0 : i32, i32
  }
  func.func @transform_8(%arg0: i32) -> (i32, i32) {
    %c0_i32 = arith.constant 0 : i32
    %c0_i32_0 = arith.constant 0 : i32
    %c0_i32_1 = arith.constant 0 : i32
    return %c0_i32, %c0_i32_0 : i32, i32
  }
  func.func @transform_9(%arg0: i32) -> (i32, i32) {
    %c0_i32 = arith.constant 0 : i32
    %c0_i32_0 = arith.constant 0 : i32
    %c0_i32_1 = arith.constant 0 : i32
    return %c0_i32, %c0_i32_0 : i32, i32
  }
  func.func @transform_10(%arg0: i32) -> (i32, i32) {
    %c0_i32 = arith.constant 0 : i32
    %c0_i32_0 = arith.constant 0 : i32
    %c0_i32_1 = arith.constant 0 : i32
    return %c0_i32, %c0_i32_0 : i32, i32
  }
  func.func @transform_11(%arg0: i32) -> (i32, i32) {
    %c0_i32 = arith.constant 0 : i32
    %c0_i32_0 = arith.constant 0 : i32
    %c0_i32_1 = arith.constant 0 : i32
    return %c0_i32, %c0_i32_0 : i32, i32
  }
  func.func @transform_12(%arg0: i32) -> (i32, i32) {
    %c0_i32 = arith.constant 0 : i32
    %c0_i32_0 = arith.constant 0 : i32
    %c0_i32_1 = arith.constant 0 : i32
    return %c0_i32, %c0_i32_0 : i32, i32
  }
  func.func @transform_13(%arg0: i32) -> (i32, i32) {
    %c0_i32 = arith.constant 0 : i32
    %c0_i32_0 = arith.constant 0 : i32
    %c0_i32_1 = arith.constant 0 : i32
    return %c0_i32, %c0_i32_0 : i32, i32
  }
  func.func @transform_14(%arg0: i32) -> (i32, i32) {
    %c0_i32 = arith.constant 0 : i32
    %c0_i32_0 = arith.constant 0 : i32
    %c0_i32_1 = arith.constant 0 : i32
    return %c0_i32, %c0_i32_0 : i32, i32
  }
  func.func @transform_15(%arg0: i32) -> (i32, i32, i32) {
    %c0_i32 = arith.constant 0 : i32
    %c0_i32_0 = arith.constant 0 : i32
    %c0_i32_1 = arith.constant 0 : i32
    return %c0_i32, %arg0, %c0_i32_0 : i32, i32, i32
  }
  func.func @transform_16(%arg0: i32) -> (i32, i32) {
    %c0_i32 = arith.constant 0 : i32
    %c0_i32_0 = arith.constant 0 : i32
    return %arg0, %c0_i32 : i32, i32
  }
  func.func @transform_17(%arg0: i32) -> (i32, i32) {
    %c0_i32 = arith.constant 0 : i32
    %c0_i32_0 = arith.constant 0 : i32
    return %arg0, %c0_i32 : i32, i32
  }
}

</mosaic_0001>

<llo_original>
// kernel: tpu_custom_call.1
$region0: #{tpu_custom_call.1}
  #allocation0 [shape = 'u32[]', space=smem, size = 0x4, offset = 0x4, fixed_abs, tag = 'smem constant byte address 0x4 - core index']
  #allocation1 [shape = 'u32[72,128]{1,0:T(1,128)}', space=vmem, size = 0x9000, scoped, tag = 'internal scratch']
  #allocation2 [shape = 'f32[8,8,128]{2,1,0:T(8,128)}', space=vmem, size = 0x8000, scoped, tag = 'scratch operand']
  #allocation3 [shape = 'f32[8,8,32]{2,1,0:T(8,128)}', space=vmem, size = 0x8000, scoped, tag = 'scratch operand']
  #allocation4 [shape = 'f32[8,8,32]{2,1,0:T(8,128)}', space=vmem, size = 0x8000, scoped, tag = 'scratch operand']
  %s0 = inlined_call_operand.hbm [shape: f32[8,8,24], index: 0, kind: input, shape index: {}]
  %s1 = inlined_call_operand.hbm [shape: f32[8,32], index: 1, kind: input, shape index: {}]
  %s2 = inlined_call_operand.hbm [shape: f32[8,32], index: 2, kind: input, shape index: {}]
  %s3 = inlined_call_operand.hbm [shape: f32[24,32], index: 3, kind: input, shape index: {}]
  %s4 = inlined_call_operand.vmem [shape: f32[1,32], index: 4, kind: input, shape index: {}]
  %s5 = inlined_call_operand.hbm [shape: f32[24,32], index: 5, kind: input, shape index: {}]
  %s6 = inlined_call_operand.vmem [shape: f32[1,32], index: 6, kind: input, shape index: {}]
  %s7 = inlined_call_operand.hbm [shape: f32[32,128], index: 7, kind: input, shape index: {}]
  %s8 = inlined_call_operand.hbm [shape: f32[32,128], index: 8, kind: input, shape index: {}]
  %s9 = inlined_call_operand.vmem [shape: f32[1,128], index: 9, kind: input, shape index: {}]
  %s10 = inlined_call_operand.hbm [shape: f32[32,32], index: 10, kind: input, shape index: {}]
  %s11 = inlined_call_operand.hbm [shape: f32[32,32], index: 11, kind: input, shape index: {}]
  %s12 = inlined_call_operand.vmem [shape: f32[1,32], index: 12, kind: input, shape index: {}]
  %s13 = inlined_call_operand.hbm [shape: f32[32,128], index: 13, kind: input, shape index: {}]
  %s14 = inlined_call_operand.vmem [shape: f32[1,128], index: 14, kind: input, shape index: {}]
  %s15 = inlined_call_operand.hbm [shape: f32[8,8,128], index: 15, kind: output, shape index: {0}]
  %s16 = inlined_call_operand.hbm [shape: f32[8,32], index: 16, kind: output, shape index: {1}]
  %s17 = inlined_call_operand.hbm [shape: f32[8,32], index: 17, kind: output, shape index: {2}]
  %18 = xla_tuple %s15, %s16, %s17
  %s19 = sld [smem:[#allocation0]]
  $region126: #{tpu_custom_call.1} parent=0
    _
  %s21 = ssub.s32 1, %s19
  %s22 = scalar_select 0, %s21, %s19
  $region1: #{tpu_custom_call.1} parent=0
    #allocation5 [shape = 'u8[32768]{0}', space=vmem, size = 0x8000, scoped, tag = 'input window, operand 0, single buffered']
    #allocation6 [shape = 's32[1]{0}', space=sflag, size = 0x4, scoped, tag = 'scoped memory for tpu_custom_call.1']
    #allocation7 [shape = 's32[1]{0}', space=sflag, size = 0x4, scoped, tag = 'scoped memory for tpu_custom_call.1']
    #allocation8 [shape = 'u8[4096]{0}', space=vmem, size = 0x1000, scoped, tag = 'input window, operand 1, single buffered']
    #allocation9 [shape = 's32[1]{0}', space=sflag, size = 0x4, scoped, tag = 'scoped memory for tpu_custom_call.1']
    #allocation10 [shape = 'u8[4096]{0}', space=vmem, size = 0x1000, scoped, tag = 'input window, operand 2, single buffered']
    #allocation11 [shape = 'u8[12288]{0}', space=vmem, size = 0x3000, scoped, tag = 'input window, operand 3, single buffered']
    #allocation12 [shape = 's32[1]{0}', space=sflag, size = 0x4, scoped, tag = 'scoped memory for tpu_custom_call.1']
    #allocation13 [shape = 'u8[12288]{0}', space=vmem, size = 0x3000, scoped, tag = 'input window, operand 5, single buffered']
    #allocation14 [shape = 'u8[16384]{0}', space=vmem, size = 0x4000, scoped, tag = 'input window, operand 7, single buffered']
    #allocation15 [shape = 's32[1]{0}', space=sflag, size = 0x4, scoped, tag = 'scoped memory for tpu_custom_call.1']
    #allocation16 [shape = 'u8[16384]{0}', space=vmem, size = 0x4000, scoped, tag = 'input window, operand 8, single buffered']
    #allocation17 [shape = 'u8[16384]{0}', space=vmem, size = 0x4000, scoped, tag = 'input window, operand 10, single buffered']
    #allocation18 [shape = 's32[1]{0}', space=sflag, size = 0x4, scoped, tag = 'scoped memory for tpu_custom_call.1']
    #allocation19 [shape = 'u8[16384]{0}', space=vmem, size = 0x4000, scoped, tag = 'input window, operand 11, single buffered']
    #allocation20 [shape = 'u8[16384]{0}', space=vmem, size = 0x4000, scoped, tag = 'input window, operand 13, single buffered']
    #allocation21 [shape = 's32[1]{0}', space=sflag, size = 0x4, scoped, tag = 'scoped memory for tpu_custom_call.1']
    #allocation22 [shape = 'u8[32768]{0}', space=vmem, size = 0x8000, scoped, tag = 'output window, operand 0, single buffered']
    #allocation23 [shape = 'u8[4096]{0}', space=vmem, size = 0x1000, scoped, tag = 'output window, operand 1, single buffered']
    #allocation24 [shape = 's32[1]{0}', space=sflag, size = 0x4, scoped, tag = 'scoped memory for tpu_custom_call.1']
    #allocation25 [shape = 'u8[4096]{0}', space=vmem, size = 0x1000, scoped, tag = 'output window, operand 2, single buffered']
    %23 = vsyncpa [#allocation6], 0
    %24 = vsyncpa [#allocation9], 0
    %25 = vsyncpa [#allocation12], 0
    %26 = vsyncpa [#allocation15], 0
    %27 = vsyncpa [#allocation18], 0
    %28 = vsyncpa [#allocation21], 0
    %29 = vsyncpa [#allocation7], 0
    %30 = vsyncpa [#allocation24], 0
    // Predicated region
    $region2: #{tpu_custom_call.1} parent=1 // pred_check
      _
    $region3: #{tpu_custom_call.1} parent=1 // pred_check_branch
      %32 = sbr.rel (0) target = $region5
    $region4: #{tpu_custom_call.1} parent=1 // pred_region
      %34 = vsyncadd [#allocation6], 0
      %s35 = sshll.u32 %s0, 4
      %s36 = int_to_ptr.hbm [resolvable:$true] %s35
      %s37 = sshll.u32 [#allocation5], 4
      %s38 = int_to_ptr.vmem [resolvable:$true] %s37
      %43 = dma.hbm_to_vmem [thread:$0]  %s36, 1024, %s38, [#allocation6], 128, 128, 8
    $region5: #{tpu_custom_call.1} parent=1 // pred_fallthru
      _
    // Predicated region
    $region6: #{tpu_custom_call.1} parent=1 // pred_check
      _
    $region7: #{tpu_custom_call.1} parent=1 // pred_check_branch
      %45 = sbr.rel (0) target = $region9
    $region8: #{tpu_custom_call.1} parent=1 // pred_region
      %47 = vsyncadd [#allocation9], 0
      %s49 = sshll.u32 %s1, 4
      %s50 = int_to_ptr.hbm [resolvable:$true] %s49
      %s51 = sshll.u32 [#allocation8], 4
      %s52 = int_to_ptr.vmem [resolvable:$true] %s51
      %54 = dma.hbm_to_vmem [thread:$0]  %s50, 128, %s52, [#allocation9]
    $region9: #{tpu_custom_call.1} parent=1 // pred_fallthru
      _
    // Predicated region
    $region10: #{tpu_custom_call.1} parent=1 // pred_check
      _
    $region11: #{tpu_custom_call.1} parent=1 // pred_check_branch
      %56 = sbr.rel (0) target = $region13
    $region12: #{tpu_custom_call.1} parent=1 // pred_region
      %58 = vsyncadd [#allocation9], 0
      %s60 = sshll.u32 %s2, 4
      %s61 = int_to_ptr.hbm [resolvable:$true] %s60
      %s62 = sshll.u32 [#allocation10], 4
      %s63 = int_to_ptr.vmem [resolvable:$true] %s62
      %65 = dma.hbm_to_vmem [thread:$0]  %s61, 128, %s63, [#allocation9]
    $region13: #{tpu_custom_call.1} parent=1 // pred_fallthru
      _
    // Predicated region
    $region14: #{tpu_custom_call.1} parent=1 // pred_check
      _
    $region15: #{tpu_custom_call.1} parent=1 // pred_check_branch
      %67 = sbr.rel (0) target = $region17
    $region16: #{tpu_custom_call.1} parent=1 // pred_region
      %69 = vsyncadd [#allocation12], 0
      %s70 = sshll.u32 %s3, 4
      %s71 = int_to_ptr.hbm [resolvable:$true] %s70
      %s72 = sshll.u32 [#allocation11], 4
      %s73 = int_to_ptr.vmem [resolvable:$true] %s72
      %78 = dma.hbm_to_vmem [thread:$0]  %s71, 384, %s73, [#allocation12], 128, 128, 8
    $region17: #{tpu_custom_call.1} parent=1 // pred_fallthru
      _
    // Predicated region
    $region18: #{tpu_custom_call.1} parent=1 // pred_check
      _
    $region19: #{tpu_custom_call.1} parent=1 // pred_check_branch
      %80 = sbr.rel (0) target = $region21
    $region20: #{tpu_custom_call.1} parent=1 // pred_region
      _
    $region21: #{tpu_custom_call.1} parent=1 // pred_fallthru
      _
    // Predicated region
    $region22: #{tpu_custom_call.1} parent=1 // pred_check
      _
    $region23: #{tpu_custom_call.1} parent=1 // pred_check_branch
      %82 = sbr.rel (0) target = $region25
    $region24: #{tpu_custom_call.1} parent=1 // pred_region
      %84 = vsyncadd [#allocation12], 0
      %s85 = sshll.u32 %s5, 4
      %s86 = int_to_ptr.hbm [resolvable:$true] %s85
      %s87 = sshll.u32 [#allocation13], 4
      %s88 = int_to_ptr.vmem [resolvable:$true] %s87
      %93 = dma.hbm_to_vmem [thread:$0]  %s86, 384, %s88, [#allocation12], 128, 128, 8
    $region25: #{tpu_custom_call.1} parent=1 // pred_fallthru
      _
    // Predicated region
    $region26: #{tpu_custom_call.1} parent=1 // pred_check
      _
    $region27: #{tpu_custom_call.1} parent=1 // pred_check_branch
      %95 = sbr.rel (0) target = $region29
    $region28: #{tpu_custom_call.1} parent=1 // pred_region
      _
    $region29: #{tpu_custom_call.1} parent=1 // pred_fallthru
      _
    // Predicated region
    $region30: #{tpu_custom_call.1} parent=1 // pred_check
      _
    $region31: #{tpu_custom_call.1} parent=1 // pred_check_branch
      %97 = sbr.rel (0) target = $region33
    $region32: #{tpu_custom_call.1} parent=1 // pred_region
      %99 = vsyncadd [#allocation15], 0
      %s100 = sshll.u32 %s7, 4
      %s101 = int_to_ptr.hbm [resolvable:$true] %s100
      %s102 = sshll.u32 [#allocation14], 4
      %s103 = int_to_ptr.vmem [resolvable:$true] %s102
      %108 = dma.hbm_to_vmem [thread:$0]  %s101, 512, %s103, [#allocation15], 128, 128, 8
    $region33: #{tpu_custom_call.1} parent=1 // pred_fallthru
      _
    // Predicated region
    $region34: #{tpu_custom_call.1} parent=1 // pred_check
      _
    $region35: #{tpu_custom_call.1} parent=1 // pred_check_branch
      %110 = sbr.rel (0) target = $region37
    $region36: #{tpu_custom_call.1} parent=1 // pred_region
      %112 = vsyncadd [#allocation15], 0
      %s113 = sshll.u32 %s8, 4
      %s114 = int_to_ptr.hbm [resolvable:$true] %s113
      %s115 = sshll.u32 [#allocation16], 4
      %s116 = int_to_ptr.vmem [resolvable:$true] %s115
      %121 = dma.hbm_to_vmem [thread:$0]  %s114, 512, %s116, [#allocation15], 128, 128, 8
    $region37: #{tpu_custom_call.1} parent=1 // pred_fallthru
      _
    // Predicated region
    $region38: #{tpu_custom_call.1} parent=1 // pred_check
      _
    $region39: #{tpu_custom_call.1} parent=1 // pred_check_branch
      %123 = sbr.rel (0) target = $region41
    $region40: #{tpu_custom_call.1} parent=1 // pred_region
      _
    $region41: #{tpu_custom_call.1} parent=1 // pred_fallthru
      _
    // Predicated region
    $region42: #{tpu_custom_call.1} parent=1 // pred_check
      _
    $region43: #{tpu_custom_call.1} parent=1 // pred_check_branch
      %125 = sbr.rel (0) target = $region45
    $region44: #{tpu_custom_call.1} parent=1 // pred_region
      %127 = vsyncadd [#allocation18], 0
      %s128 = sshll.u32 %s10, 4
      %s129 = int_to_ptr.hbm [resolvable:$true] %s128
      %s130 = sshll.u32 [#allocation17], 4
      %s131 = int_to_ptr.vmem [resolvable:$true] %s130
      %136 = dma.hbm_to_vmem [thread:$0]  %s129, 512, %s131, [#allocation18], 128, 128, 8
    $region45: #{tpu_custom_call.1} parent=1 // pred_fallthru
      _
    // Predicated region
    $region46: #{tpu_custom_call.1} parent=1 // pred_check
      _
    $region47: #{tpu_custom_call.1} parent=1 // pred_check_branch
      %138 = sbr.rel (0) target = $region49
    $region48: #{tpu_custom_call.1} parent=1 // pred_region
      %140 = vsyncadd [#allocation18], 0
      %s141 = sshll.u32 %s11, 4
      %s142 = int_to_ptr.hbm [resolvable:$true] %s141
      %s143 = sshll.u32 [#allocation19], 4
      %s144 = int_to_ptr.vmem [resolvable:$true] %s143
      %149 = dma.hbm_to_vmem [thread:$0]  %s142, 512, %s144, [#allocation18], 128, 128, 8
    $region49: #{tpu_custom_call.1} parent=1 // pred_fallthru
      _
    // Predicated region
    $region50: #{tpu_custom_call.1} parent=1 // pred_check
      _
    $region51: #{tpu_custom_call.1} parent=1 // pred_check_branch
      %151 = sbr.rel (0) target = $region53
    $region52: #{tpu_custom_call.1} parent=1 // pred_region
      _
    $region53: #{tpu_custom_call.1} parent=1 // pred_fallthru
      _
    // Predicated region
    $region54: #{tpu_custom_call.1} parent=1 // pred_check
      _
    $region55: #{tpu_custom_call.1} parent=1 // pred_check_branch
      %153 = sbr.rel (0) target = $region57
    $region56: #{tpu_custom_call.1} parent=1 // pred_region
      %155 = vsyncadd [#allocation21], 0
      %s156 = sshll.u32 %s13, 4
      %s157 = int_to_ptr.hbm [resolvable:$true] %s156
      %s158 = sshll.u32 [#allocation20], 4
      %s159 = int_to_ptr.vmem [resolvable:$true] %s158
      %164 = dma.hbm_to_vmem [thread:$0]  %s157, 512, %s159, [#allocation21], 128, 128, 8
    $region57: #{tpu_custom_call.1} parent=1 // pred_fallthru
      _
    // Predicated region
    $region58: #{tpu_custom_call.1} parent=1 // pred_check
      _
    $region59: #{tpu_custom_call.1} parent=1 // pred_check_branch
      %166 = sbr.rel (0) target = $region61
    $region60: #{tpu_custom_call.1} parent=1 // pred_region
      _
    $region61: #{tpu_custom_call.1} parent=1 // pred_fallthru
      _
    // Predicated region
    $region62: #{tpu_custom_call.1} parent=1 // pred_check
      _
    $region63: #{tpu_custom_call.1} parent=1 // pred_check_branch
      %168 = sbr.rel (0) target = $region65
    $region64: #{tpu_custom_call.1} parent=1 // pred_region
      %170 = dma.done [#allocation6], 1024
    $region65: #{tpu_custom_call.1} parent=1 // pred_fallthru
      _
    // Predicated region
    $region66: #{tpu_custom_call.1} parent=1 // pred_check
      _
    $region67: #{tpu_custom_call.1} parent=1 // pred_check_branch
      %172 = sbr.rel (0) target = $region69
    $region68: #{tpu_custom_call.1} parent=1 // pred_region
      %174 = dma.done [#allocation9], 128
    $region69: #{tpu_custom_call.1} parent=1 // pred_fallthru
      _
    // Predicated region
    $region70: #{tpu_custom_call.1} parent=1 // pred_check
      _
    $region71: #{tpu_custom_call.1} parent=1 // pred_check_branch
      %176 = sbr.rel (0) target = $region73
    $region72: #{tpu_custom_call.1} parent=1 // pred_region
      %178 = dma.done [#allocation9], 128
    $region73: #{tpu_custom_call.1} parent=1 // pred_fallthru
      _
    // Predicated region
    $region74: #{tpu_custom_call.1} parent=1 // pred_check
      _
    $region75: #{tpu_custom_call.1} parent=1 // pred_check_branch
      %180 = sbr.rel (0) target = $region77
    $region76: #{tpu_custom_call.1} parent=1 // pred_region
      %182 = dma.done [#allocation12], 384
    $region77: #{tpu_custom_call.1} parent=1 // pred_fallthru
      _
    // Predicated region
    $region78: #{tpu_custom_call.1} parent=1 // pred_check
      _
    $region79: #{tpu_custom_call.1} parent=1 // pred_check_branch
      %184 = sbr.rel (0) target = $region81
    $region80: #{tpu_custom_call.1} parent=1 // pred_region
      %186 = dma.done [#allocation12], 384
    $region81: #{tpu_custom_call.1} parent=1 // pred_fallthru
      _
    // Predicated region
    $region82: #{tpu_custom_call.1} parent=1 // pred_check
      _
    $region83: #{tpu_custom_call.1} parent=1 // pred_check_branch
      %188 = sbr.rel (0) target = $region85
    $region84: #{tpu_custom_call.1} parent=1 // pred_region
      %190 = dma.done [#allocation15], 512
    $region85: #{tpu_custom_call.1} parent=1 // pred_fallthru
      _
    // Predicated region
    $region86: #{tpu_custom_call.1} parent=1 // pred_check
      _
    $region87: #{tpu_custom_call.1} parent=1 // pred_check_branch
      %192 = sbr.rel (0) target = $region89
    $region88: #{tpu_custom_call.1} parent=1 // pred_region
      %194 = dma.done [#allocation15], 512
    $region89: #{tpu_custom_call.1} parent=1 // pred_fallthru
      _
    // Predicated region
    $region90: #{tpu_custom_call.1} parent=1 // pred_check
      _
    $region91: #{tpu_custom_call.1} parent=1 // pred_check_branch
      %196 = sbr.rel (0) target = $region93
    $region92: #{tpu_custom_call.1} parent=1 // pred_region
      %198 = dma.done [#allocation18], 512
    $region93: #{tpu_custom_call.1} parent=1 // pred_fallthru
      _
    // Predicated region
    $region94: #{tpu_custom_call.1} parent=1 // pred_check
      _
    $region95: #{tpu_custom_call.1} parent=1 // pred_check_branch
      %200 = sbr.rel (0) target = $region97
    $region96: #{tpu_custom_call.1} parent=1 // pred_region
      %202 = dma.done [#allocation18], 512
    $region97: #{tpu_custom_call.1} parent=1 // pred_fallthru
      _
    // Predicated region
    $region98: #{tpu_custom_call.1} parent=1 // pred_check
      _
    $region99: #{tpu_custom_call.1} parent=1 // pred_check_branch
      %204 = sbr.rel (0) target = $region101
    $region100: #{tpu_custom_call.1} parent=1 // pred_region
      %206 = dma.done [#allocation21], 512
    $region101: #{tpu_custom_call.1} parent=1 // pred_fallthru
      _
    %v207 = vld [vmem:[#allocation5] sm:$0xff]
    %v208 = vld [vmem:[#allocation5 + $0x8] sm:$0xff]
    %v209 = vld [vmem:[#allocation5 + $0x10] sm:$0xff]
    %v210 = vld [vmem:[#allocation5 + $0x18] sm:$0xff]
    %v211 = vld [vmem:[#allocation5 + $0x20] sm:$0xff]
    %v212 = vld [vmem:[#allocation5 + $0x28] sm:$0xff]
    %v213 = vld [vmem:[#allocation5 + $0x30] sm:$0xff]
    %v214 = vld [vmem:[#allocation5 + $0x38] sm:$0xff]
    %v215 = vld [vmem:[#allocation11] sm:$0xff]
    %v216 = vld [vmem:[#allocation11 + $0x8] sm:$0xff]
    %v217 = vld [vmem:[#allocation11 + $0x10] sm:$0xff]
    %v218 = vld [vmem:[%s4] sm:$0x1]
    %v220 = vperm.slane %v218, 0
    %vm222 = vcmask 195584
    %v224 = vsel %vm222, %v207, 0
    %v227 = vsel %vm222, %v208, 0
    %v230 = vsel %vm222, %v209, 0
    %v233 = vsel %vm222, %v210, 0
    %v236 = vsel %vm222, %v211, 0
    %v239 = vsel %vm222, %v212, 0
    %v242 = vsel %vm222, %v213, 0
    %v245 = vsel %vm222, %v214, 0
    %247 = vmatpush.msra.mxu0 0.0
    %248 = vmatpush.msra.mxu0 0.0
    %249 = vmatpush.msra.mxu0 0.0
    %250 = vmatpush.msra.mxu0 0.0
    %251 = vmatpush.msra.mxu0 0.0
    %252 = vmatpush.msra.mxu0 0.0
    %253 = vmatpush.msra.mxu0 0.0
    %254 = vmatpush.msra.mxu0 0.0
    %255 = vmatpush.msra.mxu0 0.0
    %256 = vmatpush.msra.mxu0 0.0
    %257 = vmatpush.msra.mxu0 0.0
    %258 = vmatpush.msra.mxu0 0.0
    %259 = vmatpush.msra.mxu0 0.0
    %260 = vmatpush.msra.mxu0 %v217
    %261 = vmatpush.msra.mxu0 %v216
    %262 = vmatpush.msra.mxu0 %v215
    %263 = vmatmul.f32.gmra.mxu0 %v224
    %v264 = vpop.f32.mrf.mxu0
    %v265 = vadd.f32 %v220, %v264
    %266 = vmatmul.f32.gmra.mxu0 %v227
    %v267 = vpop.f32.mrf.mxu0
    %v268 = vadd.f32 %v220, %v267
    %269 = vmatmul.f32.gmra.mxu0 %v230
    %v270 = vpop.f32.mrf.mxu0
    %v271 = vadd.f32 %v220, %v270
    %272 = vmatmul.f32.gmra.mxu0 %v233
    %v273 = vpop.f32.mrf.mxu0
    %v274 = vadd.f32 %v220, %v273
    %275 = vmatmul.f32.gmra.mxu0 %v236
    %v276 = vpop.f32.mrf.mxu0
    %v277 = vadd.f32 %v220, %v276
    %278 = vmatmul.f32.gmra.mxu0 %v239
    %v279 = vpop.f32.mrf.mxu0
    %v280 = vadd.f32 %v220, %v279
    %281 = vmatmul.f32.gmra.mxu0 %v242
    %v282 = vpop.f32.mrf.mxu0
    %v283 = vadd.f32 %v220, %v282
    %284 = vmatmul.f32.gmra.mxu0 %v245
    %v285 = vpop.f32.mrf.mxu0
    %v286 = vadd.f32 %v220, %v285
    %287 = vdwg.mxu0
    %v288 = vmax.f32 %v265, 0.0
    %v289 = vmax.f32 %v268, 0.0
    %v290 = vmax.f32 %v271, 0.0
    %v291 = vmax.f32 %v274, 0.0
    %v292 = vmax.f32 %v277, 0.0
    %v293 = vmax.f32 %v280, 0.0
    %v294 = vmax.f32 %v283, 0.0
    %v295 = vmax.f32 %v286, 0.0
    %v296 = vld [vmem:[#allocation13] sm:$0xff]
    %v297 = vld [vmem:[#allocation13 + $0x8] sm:$0xff]
    %v298 = vld [vmem:[#allocation13 + $0x10] sm:$0xff]
    %v299 = vld [vmem:[%s6] sm:$0x1]
    %v301 = vperm.slane %v299, 0
    %303 = vmatpush.msra.mxu0 0.0
    %304 = vmatpush.msra.mxu0 0.0
    %305 = vmatpush.msra.mxu0 0.0
    %306 = vmatpush.msra.mxu0 0.0
    %307 = vmatpush.msra.mxu0 0.0
    %308 = vmatpush.msra.mxu0 0.0
    %309 = vmatpush.msra.mxu0 0.0
    %310 = vmatpush.msra.mxu0 0.0
    %311 = vmatpush.msra.mxu0 0.0
    %312 = vmatpush.msra.mxu0 0.0
    %313 = vmatpush.msra.mxu0 0.0
    %314 = vmatpush.msra.mxu0 0.0
    %315 = vmatpush.msra.mxu0 0.0
    %316 = vmatpush.msra.mxu0 %v298
    %317 = vmatpush.msra.mxu0 %v297
    %318 = vmatpush.msra.mxu0 %v296
    %319 = vmatmul.f32.gmra.mxu0 %v224
    %v320 = vpop.f32.mrf.mxu0
    %v321 = vadd.f32 %v301, %v320
    %322 = vmatmul.f32.gmra.mxu0 %v227
    %v323 = vpop.f32.mrf.mxu0
    %v324 = vadd.f32 %v301, %v323
    %325 = vmatmul.f32.gmra.mxu0 %v230
    %v326 = vpop.f32.mrf.mxu0
    %v327 = vadd.f32 %v301, %v326
    %328 = vmatmul.f32.gmra.mxu0 %v233
    %v329 = vpop.f32.mrf.mxu0
    %v330 = vadd.f32 %v301, %v329
    %331 = vmatmul.f32.gmra.mxu0 %v236
    %v332 = vpop.f32.mrf.mxu0
    %v333 = vadd.f32 %v301, %v332
    %334 = vmatmul.f32.gmra.mxu0 %v239
    %v335 = vpop.f32.mrf.mxu0
    %v336 = vadd.f32 %v301, %v335
    %337 = vmatmul.f32.gmra.mxu0 %v242
    %v338 = vpop.f32.mrf.mxu0
    %v339 = vadd.f32 %v301, %v338
    %340 = vmatmul.f32.gmra.mxu0 %v245
    %v341 = vpop.f32.mrf.mxu0
    %v342 = vadd.f32 %v301, %v341
    %343 = vdwg.mxu0
    %v344 = vmax.f32 %v321, 0.0
    %v345 = vmax.f32 %v324, 0.0
    %v346 = vmax.f32 %v327, 0.0
    %v347 = vmax.f32 %v330, 0.0
    %v348 = vmax.f32 %v333, 0.0
    %v349 = vmax.f32 %v336, 0.0
    %v350 = vmax.f32 %v339, 0.0
    %v351 = vmax.f32 %v342, 0.0
    %v352 = vld [vmem:[#allocation17] sm:$0xff]
    %v353 = vld [vmem:[#allocation17 + $0x8] sm:$0xff]
    %v354 = vld [vmem:[#allocation17 + $0x10] sm:$0xff]
    %v355 = vld [vmem:[#allocation17 + $0x18] sm:$0xff]
    %v356 = vld [vmem:[%s12] sm:$0x1]
    %v358 = vperm.slane %v356, 0
    %vm360 = vcmask 261120
    %v362 = vsel %vm360, %v288, 0
    %v365 = vsel %vm360, %v289, 0
    %v368 = vsel %vm360, %v290, 0
    %v371 = vsel %vm360, %v291, 0
    %v374 = vsel %vm360, %v292, 0
    %v377 = vsel %vm360, %v293, 0
    %v380 = vsel %vm360, %v294, 0
    %v383 = vsel %vm360, %v295, 0
    %385 = vmatpush.msra.mxu0 0.0
    %386 = vmatpush.msra.mxu0 0.0
    %387 = vmatpush.msra.mxu0 0.0
    %388 = vmatpush.msra.mxu0 0.0
    %389 = vmatpush.msra.mxu0 0.0
    %390 = vmatpush.msra.mxu0 0.0
    %391 = vmatpush.msra.mxu0 0.0
    %392 = vmatpush.msra.mxu0 0.0
    %393 = vmatpush.msra.mxu0 0.0
    %394 = vmatpush.msra.mxu0 0.0
    %395 = vmatpush.msra.mxu0 0.0
    %396 = vmatpush.msra.mxu0 0.0
    %397 = vmatpush.msra.mxu0 %v355
    %398 = vmatpush.msra.mxu0 %v354
    %399 = vmatpush.msra.mxu0 %v353
    %400 = vmatpush.msra.mxu0 %v352
    %401 = vmatmul.f32.gmra.mxu0 %v362
    %v402 = vpop.f32.mrf.mxu0
    %v403 = vadd.f32 %v358, %v402
    %404 = vmatmul.f32.gmra.mxu0 %v365
    %v405 = vpop.f32.mrf.mxu0
    %v406 = vadd.f32 %v358, %v405
    %407 = vmatmul.f32.gmra.mxu0 %v368
    %v408 = vpop.f32.mrf.mxu0
    %v409 = vadd.f32 %v358, %v408
    %410 = vmatmul.f32.gmra.mxu0 %v371
    %v411 = vpop.f32.mrf.mxu0
    %v412 = vadd.f32 %v358, %v411
    %413 = vmatmul.f32.gmra.mxu0 %v374
    %v414 = vpop.f32.mrf.mxu0
    %v415 = vadd.f32 %v358, %v414
    %416 = vmatmul.f32.gmra.mxu0 %v377
    %v417 = vpop.f32.mrf.mxu0
    %v418 = vadd.f32 %v358, %v417
    %419 = vmatmul.f32.gmra.mxu0 %v380
    %v420 = vpop.f32.mrf.mxu0
    %v421 = vadd.f32 %v358, %v420
    %422 = vmatmul.f32.gmra.mxu0 %v383
    %v423 = vpop.f32.mrf.mxu0
    %v424 = vadd.f32 %v358, %v423
    %425 = vdwg.mxu0
    %426 = vst.msk [vmem:[#allocation3] sm:$0xff] %vm360, %v403
    %427 = vst.msk [vmem:[#allocation3 + $0x8] sm:$0xff] %vm360, %v406
    %428 = vst.msk [vmem:[#allocation3 + $0x10] sm:$0xff] %vm360, %v409
    %429 = vst.msk [vmem:[#allocation3 + $0x18] sm:$0xff] %vm360, %v412
    %430 = vst.msk [vmem:[#allocation3 + $0x20] sm:$0xff] %vm360, %v415
    %431 = vst.msk [vmem:[#allocation3 + $0x28] sm:$0xff] %vm360, %v418
    %432 = vst.msk [vmem:[#allocation3 + $0x30] sm:$0xff] %vm360, %v421
    %433 = vst.msk [vmem:[#allocation3 + $0x38] sm:$0xff] %vm360, %v424
    %v434 = vld [vmem:[#allocation14] sm:$0xff]
    %v435 = vld [vmem:[#allocation14 + $0x8] sm:$0xff]
    %v436 = vld [vmem:[#allocation14 + $0x10] sm:$0xff]
    %v437 = vld [vmem:[#allocation14 + $0x18] sm:$0xff]
    %v438 = vld [vmem:[%s9] sm:$0x1]
    %v440 = vperm.slane %v438, 0
    %v443 = vsel %vm360, %v344, 0
    %v446 = vsel %vm360, %v345, 0
    %v449 = vsel %vm360, %v346, 0
    %v452 = vsel %vm360, %v347, 0
    %v455 = vsel %vm360, %v348, 0
    %v458 = vsel %vm360, %v349, 0
    %v461 = vsel %vm360, %v350, 0
    %v464 = vsel %vm360, %v351, 0
    %466 = vmatpush.msra.mxu0 0.0
    %467 = vmatpush.msra.mxu0 0.0
    %468 = vmatpush.msra.mxu0 0.0
    %469 = vmatpush.msra.mxu0 0.0
    %470 = vmatpush.msra.mxu0 0.0
    %471 = vmatpush.msra.mxu0 0.0
    %472 = vmatpush.msra.mxu0 0.0
    %473 = vmatpush.msra.mxu0 0.0
    %474 = vmatpush.msra.mxu0 0.0
    %475 = vmatpush.msra.mxu0 0.0
    %476 = vmatpush.msra.mxu0 0.0
    %477 = vmatpush.msra.mxu0 0.0
    %478 = vmatpush.msra.mxu0 %v437
    %479 = vmatpush.msra.mxu0 %v436
    %480 = vmatpush.msra.mxu0 %v435
    %481 = vmatpush.msra.mxu0 %v434
    %482 = vmatmul.f32.gmra.mxu0 %v443
    %v483 = vpop.f32.mrf.mxu0
    %v484 = vadd.f32 %v440, %v483
    %485 = vmatmul.f32.gmra.mxu0 %v446
    %v486 = vpop.f32.mrf.mxu0
    %v487 = vadd.f32 %v440, %v486
    %488 = vmatmul.f32.gmra.mxu0 %v449
    %v489 = vpop.f32.mrf.mxu0
    %v490 = vadd.f32 %v440, %v489
    %491 = vmatmul.f32.gmra.mxu0 %v452
    %v492 = vpop.f32.mrf.mxu0
    %v493 = vadd.f32 %v440, %v492
    %494 = vmatmul.f32.gmra.mxu0 %v455
    %v495 = vpop.f32.mrf.mxu0
    %v496 = vadd.f32 %v440, %v495
    %497 = vmatmul.f32.gmra.mxu0 %v458
    %v498 = vpop.f32.mrf.mxu0
    %v499 = vadd.f32 %v440, %v498
    %500 = vmatmul.f32.gmra.mxu0 %v461
    %v501 = vpop.f32.mrf.mxu0
    %v502 = vadd.f32 %v440, %v501
    %503 = vmatmul.f32.gmra.mxu0 %v464
    %v504 = vpop.f32.mrf.mxu0
    %v505 = vadd.f32 %v440, %v504
    %506 = vdwg.mxu0
    %507 = vst [vmem:[#allocation2] sm:$0xff] %v484
    %508 = vst [vmem:[#allocation2 + $0x8] sm:$0xff] %v487
    %509 = vst [vmem:[#allocation2 + $0x10] sm:$0xff] %v490
    %510 = vst [vmem:[#allocation2 + $0x18] sm:$0xff] %v493
    %511 = vst [vmem:[#allocation2 + $0x20] sm:$0xff] %v496
    %512 = vst [vmem:[#allocation2 + $0x28] sm:$0xff] %v499
    %513 = vst [vmem:[#allocation2 + $0x30] sm:$0xff] %v502
    %514 = vst [vmem:[#allocation2 + $0x38] sm:$0xff] %v505
    %v515 = vld [vmem:[#allocation16] sm:$0xff]
    %v516 = vld [vmem:[#allocation16 + $0x8] sm:$0xff]
    %v517 = vld [vmem:[#allocation16 + $0x10] sm:$0xff]
    %v518 = vld [vmem:[#allocation16 + $0x18] sm:$0xff]
    %v519 = vld [vmem:[#allocation8] sm:$0xff]
    %v520 = vld [vmem:[#allocation10] sm:$0xff]
    %v521 = vld [vmem:[#allocation2] sm:$0xff]
    %v523 = vsel %vm360, %v519, 0
    %525 = vmatpush.msra.mxu0 0.0
    %526 = vmatpush.msra.mxu0 0.0
    %527 = vmatpush.msra.mxu0 0.0
    %528 = vmatpush.msra.mxu0 0.0
    %529 = vmatpush.msra.mxu0 0.0
    %530 = vmatpush.msra.mxu0 0.0
    %531 = vmatpush.msra.mxu0 0.0
    %532 = vmatpush.msra.mxu0 0.0
    %533 = vmatpush.msra.mxu0 0.0
    %534 = vmatpush.msra.mxu0 0.0
    %535 = vmatpush.msra.mxu0 0.0
    %536 = vmatpush.msra.mxu0 0.0
    %537 = vmatpush.msra.mxu0 %v518
    %538 = vmatpush.msra.mxu0 %v517
    %539 = vmatpush.msra.mxu0 %v516
    %540 = vmatpush.msra.mxu0 %v515
    %541 = vmatmul.f32.gmra.mxu0 %v523
    %v542 = vpop.f32.mrf.mxu0
    %v543 = vadd.f32 0.0, %v542
    %544 = vdwg.mxu0
    %v545 = vadd.f32 %v521, %v543
    %v546 = vmul.f32 %v545, 0.5
    %v547 = vtanh.pop %v546
    %v548 = vmul.f32 %v547, 0.5
    %v549 = vadd.f32 %v548, 0.5
    %v550 = vtanh.pop %v545
    %552 = vrot.lane.b32.xlu0 %v520, 32
    %v553 = vpop.permute.xlu0 %552
    %v555 = vmul.f32 %v549, %v553
    %557 = vrot.lane.b32.xlu0 %v550, 64
    %v558 = vpop.permute.xlu0 %557
    %v560 = vmul.f32 %v549, %v558
    %562 = vrot.lane.b32.xlu0 %v560, 32
    %v563 = vpop.permute.xlu0 %562
    %v565 = vadd.f32 %v555, %v563
    %v566 = vtanh.pop %v565
    %568 = vrot.lane.b32.xlu0 %v566, 64
    %v569 = vpop.permute.xlu0 %568
    %v571 = vmul.f32 %v549, %v569
    %573 = vrot.lane.b32.xlu0 %v571, 32
    %v574 = vpop.permute.xlu0 %573
    %576 = vst.msk [vmem:[#allocation4] sm:$0xff] %vm360, %v574
    %s577 = scalar_lea.vmem [#allocation2], 8
    %v578 = vld [vmem:[%s577] sm:$0xff]
    %v579 = vsel %vm360, %v574, 0
    %581 = vmatpush.msra.mxu0 0.0
    %582 = vmatpush.msra.mxu0 0.0
    %583 = vmatpush.msra.mxu0 0.0
    %584 = vmatpush.msra.mxu0 0.0
    %585 = vmatpush.msra.mxu0 0.0
    %586 = vmatpush.msra.mxu0 0.0
    %587 = vmatpush.msra.mxu0 0.0
    %588 = vmatpush.msra.mxu0 0.0
    %589 = vmatpush.msra.mxu0 0.0
    %590 = vmatpush.msra.mxu0 0.0
    %591 = vmatpush.msra.mxu0 0.0
    %592 = vmatpush.msra.mxu0 0.0
    %593 = vmatpush.msra.mxu0 %v518
    %594 = vmatpush.msra.mxu0 %v517
    %595 = vmatpush.msra.mxu0 %v516
    %596 = vmatpush.msra.mxu0 %v515
    %597 = vmatmul.f32.gmra.mxu0 %v579
    %v598 = vpop.f32.mrf.mxu0
    %v599 = vadd.f32 0.0, %v598
    %600 = vdwg.mxu0
    %v601 = vadd.f32 %v578, %v599
    %v602 = vmul.f32 %v601, 0.5
    %v603 = vtanh.pop %v602
    %v604 = vmul.f32 %v603, 0.5
    %v605 = vadd.f32 %v604, 0.5
    %v606 = vtanh.pop %v601
    %v607 = vmul.f32 %v605, %v565
    %609 = vrot.lane.b32.xlu0 %v606, 64
    %v610 = vpop.permute.xlu0 %609
    %v612 = vmul.f32 %v605, %v610
    %614 = vrot.lane.b32.xlu0 %v612, 32
    %v615 = vpop.permute.xlu0 %614
    %v617 = vadd.f32 %v607, %v615
    %v618 = vtanh.pop %v617
    %620 = vrot.lane.b32.xlu0 %v618, 64
    %v621 = vpop.permute.xlu0 %620
    %v623 = vmul.f32 %v605, %v621
    %625 = vrot.lane.b32.xlu0 %v623, 32
    %v626 = vpop.permute.xlu0 %625
    %s628 = scalar_lea.vmem [#allocation4], 8
    %629 = vst.msk [vmem:[%s628] sm:$0xff] %vm360, %v626
    %s630 = scalar_lea.vmem [#allocation2], 16
    %v631 = vld [vmem:[%s630] sm:$0xff]
    %v632 = vsel %vm360, %v626, 0
    %634 = vmatpush.msra.mxu0 0.0
    %635 = vmatpush.msra.mxu0 0.0
    %636 = vmatpush.msra.mxu0 0.0
    %637 = vmatpush.msra.mxu0 0.0
    %638 = vmatpush.msra.mxu0 0.0
    %639 = vmatpush.msra.mxu0 0.0
    %640 = vmatpush.msra.mxu0 0.0
    %641 = vmatpush.msra.mxu0 0.0
    %642 = vmatpush.msra.mxu0 0.0
    %643 = vmatpush.msra.mxu0 0.0
    %644 = vmatpush.msra.mxu0 0.0
    %645 = vmatpush.msra.mxu0 0.0
    %646 = vmatpush.msra.mxu0 %v518
    %647 = vmatpush.msra.mxu0 %v517
    %648 = vmatpush.msra.mxu0 %v516
    %649 = vmatpush.msra.mxu0 %v515
    %650 = vmatmul.f32.gmra.mxu0 %v632
    %v651 = vpop.f32.mrf.mxu0
    %v652 = vadd.f32 0.0, %v651
    %653 = vdwg.mxu0
    %v654 = vadd.f32 %v631, %v652
    %v655 = vmul.f32 %v654, 0.5
    %v656 = vtanh.pop %v655
    %v657 = vmul.f32 %v656, 0.5
    %v658 = vadd.f32 %v657, 0.5
    %v659 = vtanh.pop %v654
    %v660 = vmul.f32 %v658, %v617
    %662 = vrot.lane.b32.xlu0 %v659, 64
    %v663 = vpop.permute.xlu0 %662
    %v665 = vmul.f32 %v658, %v663
    %667 = vrot.lane.b32.xlu0 %v665, 32
    %v668 = vpop.permute.xlu0 %667
    %v670 = vadd.f32 %v660, %v668
    %v671 = vtanh.pop %v670
    %673 = vrot.lane.b32.xlu0 %v671, 64
    %v674 = vpop.permute.xlu0 %673
    %v676 = vmul.f32 %v658, %v674
    %678 = vrot.lane.b32.xlu0 %v676, 32
    %v679 = vpop.permute.xlu0 %678
    %s681 = scalar_lea.vmem [#allocation4], 16
    %682 = vst.msk [vmem:[%s681] sm:$0xff] %vm360, %v679
    %s683 = scalar_lea.vmem [#allocation2], 24
    %v684 = vld [vmem:[%s683] sm:$0xff]
    %v685 = vsel %vm360, %v679, 0
    %687 = vmatpush.msra.mxu0 0.0
    %688 = vmatpush.msra.mxu0 0.0
    %689 = vmatpush.msra.mxu0 0.0
    %690 = vmatpush.msra.mxu0 0.0
    %691 = vmatpush.msra.mxu0 0.0
    %692 = vmatpush.msra.mxu0 0.0
    %693 = vmatpush.msra.mxu0 0.0
    %694 = vmatpush.msra.mxu0 0.0
    %695 = vmatpush.msra.mxu0 0.0
    %696 = vmatpush.msra.mxu0 0.0
    %697 = vmatpush.msra.mxu0 0.0
    %698 = vmatpush.msra.mxu0 0.0
    %699 = vmatpush.msra.mxu0 %v518
    %700 = vmatpush.msra.mxu0 %v517
    %701 = vmatpush.msra.mxu0 %v516
    %702 = vmatpush.msra.mxu0 %v515
    %703 = vmatmul.f32.gmra.mxu0 %v685
    %v704 = vpop.f32.mrf.mxu0
    %v705 = vadd.f32 0.0, %v704
    %706 = vdwg.mxu0
    %v707 = vadd.f32 %v684, %v705
    %v708 = vmul.f32 %v707, 0.5
    %v709 = vtanh.pop %v708
    %v710 = vmul.f32 %v709, 0.5
    %v711 = vadd.f32 %v710, 0.5
    %v712 = vtanh.pop %v707
    %v713 = vmul.f32 %v711, %v670
    %715 = vrot.lane.b32.xlu0 %v712, 64
    %v716 = vpop.permute.xlu0 %715
    %v718 = vmul.f32 %v711, %v716
    %720 = vrot.lane.b32.xlu0 %v718, 32
    %v721 = vpop.permute.xlu0 %720
    %v723 = vadd.f32 %v713, %v721
    %v724 = vtanh.pop %v723
    %726 = vrot.lane.b32.xlu0 %v724, 64
    %v727 = vpop.permute.xlu0 %726
    %v729 = vmul.f32 %v711, %v727
    %731 = vrot.lane.b32.xlu0 %v729, 32
    %v732 = vpop.permute.xlu0 %731
    %s734 = scalar_lea.vmem [#allocation4], 24
    %735 = vst.msk [vmem:[%s734] sm:$0xff] %vm360, %v732
    %s736 = scalar_lea.vmem [#allocation2], 32
    %v737 = vld [vmem:[%s736] sm:$0xff]
    %v738 = vsel %vm360, %v732, 0
    %740 = vmatpush.msra.mxu0 0.0
    %741 = vmatpush.msra.mxu0 0.0
    %742 = vmatpush.msra.mxu0 0.0
    %743 = vmatpush.msra.mxu0 0.0
    %744 = vmatpush.msra.mxu0 0.0
    %745 = vmatpush.msra.mxu0 0.0
    %746 = vmatpush.msra.mxu0 0.0
    %747 = vmatpush.msra.mxu0 0.0
    %748 = vmatpush.msra.mxu0 0.0
    %749 = vmatpush.msra.mxu0 0.0
    %750 = vmatpush.msra.mxu0 0.0
    %751 = vmatpush.msra.mxu0 0.0
    %752 = vmatpush.msra.mxu0 %v518
    %753 = vmatpush.msra.mxu0 %v517
    %754 = vmatpush.msra.mxu0 %v516
    %755 = vmatpush.msra.mxu0 %v515
    %756 = vmatmul.f32.gmra.mxu0 %v738
    %v757 = vpop.f32.mrf.mxu0
    %v758 = vadd.f32 0.0, %v757
    %759 = vdwg.mxu0
    %v760 = vadd.f32 %v737, %v758
    %v761 = vmul.f32 %v760, 0.5
    %v762 = vtanh.pop %v761
    %v763 = vmul.f32 %v762, 0.5
    %v764 = vadd.f32 %v763, 0.5
    %v765 = vtanh.pop %v760
    %v766 = vmul.f32 %v764, %v723
    %768 = vrot.lane.b32.xlu0 %v765, 64
    %v769 = vpop.permute.xlu0 %768
    %v771 = vmul.f32 %v764, %v769
    %773 = vrot.lane.b32.xlu0 %v771, 32
    %v774 = vpop.permute.xlu0 %773
    %v776 = vadd.f32 %v766, %v774
    %v777 = vtanh.pop %v776
    %779 = vrot.lane.b32.xlu0 %v777, 64
    %v780 = vpop.permute.xlu0 %779
    %v782 = vmul.f32 %v764, %v780
    %784 = vrot.lane.b32.xlu0 %v782, 32
    %v785 = vpop.permute.xlu0 %784
    %s787 = scalar_lea.vmem [#allocation4], 32
    %788 = vst.msk [vmem:[%s787] sm:$0xff] %vm360, %v785
    %s789 = scalar_lea.vmem [#allocation2], 40
    %v790 = vld [vmem:[%s789] sm:$0xff]
    %v791 = vsel %vm360, %v785, 0
    %793 = vmatpush.msra.mxu0 0.0
    %794 = vmatpush.msra.mxu0 0.0
    %795 = vmatpush.msra.mxu0 0.0
    %796 = vmatpush.msra.mxu0 0.0
    %797 = vmatpush.msra.mxu0 0.0
    %798 = vmatpush.msra.mxu0 0.0
    %799 = vmatpush.msra.mxu0 0.0
    %800 = vmatpush.msra.mxu0 0.0
    %801 = vmatpush.msra.mxu0 0.0
    %802 = vmatpush.msra.mxu0 0.0
    %803 = vmatpush.msra.mxu0 0.0
    %804 = vmatpush.msra.mxu0 0.0
    %805 = vmatpush.msra.mxu0 %v518
    %806 = vmatpush.msra.mxu0 %v517
    %807 = vmatpush.msra.mxu0 %v516
    %808 = vmatpush.msra.mxu0 %v515
    %809 = vmatmul.f32.gmra.mxu0 %v791
    %v810 = vpop.f32.mrf.mxu0
    %v811 = vadd.f32 0.0, %v810
    %812 = vdwg.mxu0
    %v813 = vadd.f32 %v790, %v811
    %v814 = vmul.f32 %v813, 0.5
    %v815 = vtanh.pop %v814
    %v816 = vmul.f32 %v815, 0.5
    %v817 = vadd.f32 %v816, 0.5
    %v818 = vtanh.pop %v813
    %v819 = vmul.f32 %v817, %v776
    %821 = vrot.lane.b32.xlu0 %v818, 64
    %v822 = vpop.permute.xlu0 %821
    %v824 = vmul.f32 %v817, %v822
    %826 = vrot.lane.b32.xlu0 %v824, 32
    %v827 = vpop.permute.xlu0 %826
    %v829 = vadd.f32 %v819, %v827
    %v830 = vtanh.pop %v829
    %832 = vrot.lane.b32.xlu0 %v830, 64
    %v833 = vpop.permute.xlu0 %832
    %v835 = vmul.f32 %v817, %v833
    %837 = vrot.lane.b32.xlu0 %v835, 32
    %v838 = vpop.permute.xlu0 %837
    %s840 = scalar_lea.vmem [#allocation4], 40
    %841 = vst.msk [vmem:[%s840] sm:$0xff] %vm360, %v838
    %s842 = scalar_lea.vmem [#allocation2], 48
    %v843 = vld [vmem:[%s842] sm:$0xff]
    %v844 = vsel %vm360, %v838, 0
    %846 = vmatpush.msra.mxu0 0.0
    %847 = vmatpush.msra.mxu0 0.0
    %848 = vmatpush.msra.mxu0 0.0
    %849 = vmatpush.msra.mxu0 0.0
    %850 = vmatpush.msra.mxu0 0.0
    %851 = vmatpush.msra.mxu0 0.0
    %852 = vmatpush.msra.mxu0 0.0
    %853 = vmatpush.msra.mxu0 0.0
    %854 = vmatpush.msra.mxu0 0.0
    %855 = vmatpush.msra.mxu0 0.0
    %856 = vmatpush.msra.mxu0 0.0
    %857 = vmatpush.msra.mxu0 0.0
    %858 = vmatpush.msra.mxu0 %v518
    %859 = vmatpush.msra.mxu0 %v517
    %860 = vmatpush.msra.mxu0 %v516
    %861 = vmatpush.msra.mxu0 %v515
    %862 = vmatmul.f32.gmra.mxu0 %v844
    %v863 = vpop.f32.mrf.mxu0
    %v864 = vadd.f32 0.0, %v863
    %865 = vdwg.mxu0
    %v866 = vadd.f32 %v843, %v864
    %v867 = vmul.f32 %v866, 0.5
    %v868 = vtanh.pop %v867
    %v869 = vmul.f32 %v868, 0.5
    %v870 = vadd.f32 %v869, 0.5
    %v871 = vtanh.pop %v866
    %v872 = vmul.f32 %v870, %v829
    %874 = vrot.lane.b32.xlu0 %v871, 64
    %v875 = vpop.permute.xlu0 %874
    %v877 = vmul.f32 %v870, %v875
    %879 = vrot.lane.b32.xlu0 %v877, 32
    %v880 = vpop.permute.xlu0 %879
    %v882 = vadd.f32 %v872, %v880
    %v883 = vtanh.pop %v882
    %885 = vrot.lane.b32.xlu0 %v883, 64
    %v886 = vpop.permute.xlu0 %885
    %v888 = vmul.f32 %v870, %v886
    %890 = vrot.lane.b32.xlu0 %v888, 32
    %v891 = vpop.permute.xlu0 %890
    %s893 = scalar_lea.vmem [#allocation4], 48
    %894 = vst.msk [vmem:[%s893] sm:$0xff] %vm360, %v891
    %s895 = scalar_lea.vmem [#allocation2], 56
    %v896 = vld [vmem:[%s895] sm:$0xff]
    %v897 = vsel %vm360, %v891, 0
    %899 = vmatpush.msra.mxu0 0.0
    %900 = vmatpush.msra.mxu0 0.0
    %901 = vmatpush.msra.mxu0 0.0
    %902 = vmatpush.msra.mxu0 0.0
    %903 = vmatpush.msra.mxu0 0.0
    %904 = vmatpush.msra.mxu0 0.0
    %905 = vmatpush.msra.mxu0 0.0
    %906 = vmatpush.msra.mxu0 0.0
    %907 = vmatpush.msra.mxu0 0.0
    %908 = vmatpush.msra.mxu0 0.0
    %909 = vmatpush.msra.mxu0 0.0
    %910 = vmatpush.msra.mxu0 0.0
    %911 = vmatpush.msra.mxu0 %v518
    %912 = vmatpush.msra.mxu0 %v517
    %913 = vmatpush.msra.mxu0 %v516
    %914 = vmatpush.msra.mxu0 %v515
    %915 = vmatmul.f32.gmra.mxu0 %v897
    %v916 = vpop.f32.mrf.mxu0
    %v917 = vadd.f32 0.0, %v916
    %918 = vdwg.mxu0
    %v919 = vadd.f32 %v896, %v917
    %v920 = vmul.f32 %v919, 0.5
    %v921 = vtanh.pop %v920
    %v922 = vmul.f32 %v921, 0.5
    %v923 = vadd.f32 %v922, 0.5
    %v924 = vtanh.pop %v919
    %v925 = vmul.f32 %v923, %v882
    %927 = vrot.lane.b32.xlu0 %v924, 64
    %v928 = vpop.permute.xlu0 %927
    %v930 = vmul.f32 %v923, %v928
    %932 = vrot.lane.b32.xlu0 %v930, 32
    %v933 = vpop.permute.xlu0 %932
    %v935 = vadd.f32 %v925, %v933
    %v936 = vtanh.pop %v935
    %938 = vrot.lane.b32.xlu0 %v936, 64
    %v939 = vpop.permute.xlu0 %938
    %v941 = vmul.f32 %v923, %v939
    %943 = vrot.lane.b32.xlu0 %v941, 32
    %v944 = vpop.permute.xlu0 %943
    %s946 = scalar_lea.vmem [#allocation4], 56
    %947 = vst.msk [vmem:[%s946] sm:$0xff] %vm360, %v944
    %948 = vst.msk [vmem:[#allocation23] sm:$0xff] %vm360, %v944
    %950 = vrot.lane.b32.xlu0 %v935, 96
    %v951 = vpop.permute.xlu0 %950
    %953 = vst.msk [vmem:[#allocation25] sm:$0xff] %vm360, %v951
    %v954 = vld [vmem:[#allocation4] sm:$0xff]
    %v955 = vld [vmem:[#allocation4 + $0x8] sm:$0xff]
    %v956 = vld [vmem:[#allocation4 + $0x10] sm:$0xff]
    %v957 = vld [vmem:[#allocation4 + $0x18] sm:$0xff]
    %v958 = vld [vmem:[#allocation4 + $0x20] sm:$0xff]
    %v959 = vld [vmem:[#allocation4 + $0x28] sm:$0xff]
    %v960 = vld [vmem:[#allocation4 + $0x30] sm:$0xff]
    %v961 = vld [vmem:[#allocation4 + $0x38] sm:$0xff]
    %v962 = vld [vmem:[#allocation3] sm:$0xff]
    %v963 = vld [vmem:[#allocation3 + $0x8] sm:$0xff]
    %v964 = vld [vmem:[#allocation3 + $0x10] sm:$0xff]
    %v965 = vld [vmem:[#allocation3 + $0x18] sm:$0xff]
    %v966 = vld [vmem:[#allocation3 + $0x20] sm:$0xff]
    %v967 = vld [vmem:[#allocation3 + $0x28] sm:$0xff]
    %v968 = vld [vmem:[#allocation3 + $0x30] sm:$0xff]
    %v969 = vld [vmem:[#allocation3 + $0x38] sm:$0xff]
    %v970 = vld [vmem:[#allocation19] sm:$0xff]
    %v971 = vld [vmem:[#allocation19 + $0x8] sm:$0xff]
    %v972 = vld [vmem:[#allocation19 + $0x10] sm:$0xff]
    %v973 = vld [vmem:[#allocation19 + $0x18] sm:$0xff]
    %v975 = vsel %vm360, %v954, 0
    %v978 = vsel %vm360, %v955, 0
    %v981 = vsel %vm360, %v956, 0
    %v984 = vsel %vm360, %v957, 0
    %v987 = vsel %vm360, %v958, 0
    %v990 = vsel %vm360, %v959, 0
    %v993 = vsel %vm360, %v960, 0
    %v996 = vsel %vm360, %v961, 0
    %998 = vmatpush.msra.mxu0 0.0
    %999 = vmatpush.msra.mxu0 0.0
    %1000 = vmatpush.msra.mxu0 0.0
    %1001 = vmatpush.msra.mxu0 0.0
    %1002 = vmatpush.msra.mxu0 0.0
    %1003 = vmatpush.msra.mxu0 0.0
    %1004 = vmatpush.msra.mxu0 0.0
    %1005 = vmatpush.msra.mxu0 0.0
    %1006 = vmatpush.msra.mxu0 0.0
    %1007 = vmatpush.msra.mxu0 0.0
    %1008 = vmatpush.msra.mxu0 0.0
    %1009 = vmatpush.msra.mxu0 0.0
    %1010 = vmatpush.msra.mxu0 %v973
    %1011 = vmatpush.msra.mxu0 %v972
    %1012 = vmatpush.msra.mxu0 %v971
    %1013 = vmatpush.msra.mxu0 %v970
    %1014 = vmatmul.f32.gmra.mxu0 %v975
    %v1015 = vpop.f32.mrf.mxu0
    %v1016 = vadd.f32 0.0, %v1015
    %1017 = vmatmul.f32.gmra.mxu0 %v978
    %v1018 = vpop.f32.mrf.mxu0
    %v1019 = vadd.f32 0.0, %v1018
    %1020 = vmatmul.f32.gmra.mxu0 %v981
    %v1021 = vpop.f32.mrf.mxu0
    %v1022 = vadd.f32 0.0, %v1021
    %1023 = vmatmul.f32.gmra.mxu0 %v984
    %v1024 = vpop.f32.mrf.mxu0
    %v1025 = vadd.f32 0.0, %v1024
    %1026 = vmatmul.f32.gmra.mxu0 %v987
    %v1027 = vpop.f32.mrf.mxu0
    %v1028 = vadd.f32 0.0, %v1027
    %1029 = vmatmul.f32.gmra.mxu0 %v990
    %v1030 = vpop.f32.mrf.mxu0
    %v1031 = vadd.f32 0.0, %v1030
    %1032 = vmatmul.f32.gmra.mxu0 %v993
    %v1033 = vpop.f32.mrf.mxu0
    %v1034 = vadd.f32 0.0, %v1033
    %1035 = vmatmul.f32.gmra.mxu0 %v996
    %v1036 = vpop.f32.mrf.mxu0
    %v1037 = vadd.f32 0.0, %v1036
    %1038 = vdwg.mxu0
    %v1039 = vadd.f32 %v962, %v1016
    %v1040 = vadd.f32 %v963, %v1019
    %v1041 = vadd.f32 %v964, %v1022
    %v1042 = vadd.f32 %v965, %v1025
    %v1043 = vadd.f32 %v966, %v1028
    %v1044 = vadd.f32 %v967, %v1031
    %v1045 = vadd.f32 %v968, %v1034
    %v1046 = vadd.f32 %v969, %v1037
    %v1047 = vmax.f32 %v1039, 0.0
    %v1048 = vmax.f32 %v1040, 0.0
    %v1049 = vmax.f32 %v1041, 0.0
    %v1050 = vmax.f32 %v1042, 0.0
    %v1051 = vmax.f32 %v1043, 0.0
    %v1052 = vmax.f32 %v1044, 0.0
    %v1053 = vmax.f32 %v1045, 0.0
    %v1054 = vmax.f32 %v1046, 0.0
    %v1055 = vld [vmem:[#allocation20] sm:$0xff]
    %v1056 = vld [vmem:[#allocation20 + $0x8] sm:$0xff]
    %v1057 = vld [vmem:[#allocation20 + $0x10] sm:$0xff]
    %v1058 = vld [vmem:[#allocation20 + $0x18] sm:$0xff]
    %v1059 = vld [vmem:[%s14] sm:$0x1]
    %v1061 = vperm.slane %v1059, 0
    %v1064 = vsel %vm360, %v1047, 0
    %v1067 = vsel %vm360, %v1048, 0
    %v1070 = vsel %vm360, %v1049, 0
    %v1073 = vsel %vm360, %v1050, 0
    %v1076 = vsel %vm360, %v1051, 0
    %v1079 = vsel %vm360, %v1052, 0
    %v1082 = vsel %vm360, %v1053, 0
    %v1085 = vsel %vm360, %v1054, 0
    %1087 = vmatpush.msra.mxu0 0.0
    %1088 = vmatpush.msra.mxu0 0.0
    %1089 = vmatpush.msra.mxu0 0.0
    %1090 = vmatpush.msra.mxu0 0.0
    %1091 = vmatpush.msra.mxu0 0.0
    %1092 = vmatpush.msra.mxu0 0.0
    %1093 = vmatpush.msra.mxu0 0.0
    %1094 = vmatpush.msra.mxu0 0.0
    %1095 = vmatpush.msra.mxu0 0.0
    %1096 = vmatpush.msra.mxu0 0.0
    %1097 = vmatpush.msra.mxu0 0.0
    %1098 = vmatpush.msra.mxu0 0.0
    %1099 = vmatpush.msra.mxu0 %v1058
    %1100 = vmatpush.msra.mxu0 %v1057
    %1101 = vmatpush.msra.mxu0 %v1056
    %1102 = vmatpush.msra.mxu0 %v1055
    %1103 = vmatmul.f32.gmra.mxu0 %v1064
    %v1104 = vpop.f32.mrf.mxu0
    %v1105 = vadd.f32 %v1061, %v1104
    %1106 = vmatmul.f32.gmra.mxu0 %v1067
    %v1107 = vpop.f32.mrf.mxu0
    %v1108 = vadd.f32 %v1061, %v1107
    %1109 = vmatmul.f32.gmra.mxu0 %v1070
    %v1110 = vpop.f32.mrf.mxu0
    %v1111 = vadd.f32 %v1061, %v1110
    %1112 = vmatmul.f32.gmra.mxu0 %v1073
    %v1113 = vpop.f32.mrf.mxu0
    %v1114 = vadd.f32 %v1061, %v1113
    %1115 = vmatmul.f32.gmra.mxu0 %v1076
    %v1116 = vpop.f32.mrf.mxu0
    %v1117 = vadd.f32 %v1061, %v1116
    %1118 = vmatmul.f32.gmra.mxu0 %v1079
    %v1119 = vpop.f32.mrf.mxu0
    %v1120 = vadd.f32 %v1061, %v1119
    %1121 = vmatmul.f32.gmra.mxu0 %v1082
    %v1122 = vpop.f32.mrf.mxu0
    %v1123 = vadd.f32 %v1061, %v1122
    %1124 = vmatmul.f32.gmra.mxu0 %v1085
    %v1125 = vpop.f32.mrf.mxu0
    %v1126 = vadd.f32 %v1061, %v1125
    %1127 = vdwg.mxu0
    %v1128 = vtanh.pop %v1105
    %v1129 = vtanh.pop %v1108
    %v1130 = vtanh.pop %v1111
    %v1131 = vtanh.pop %v1114
    %v1132 = vtanh.pop %v1117
    %v1133 = vtanh.pop %v1120
    %v1134 = vtanh.pop %v1123
    %v1135 = vtanh.pop %v1126
    %1136 = vst [vmem:[#allocation22] sm:$0xff] %v1128
    %1137 = vst [vmem:[#allocation22 + $0x8] sm:$0xff] %v1129
    %1138 = vst [vmem:[#allocation22 + $0x10] sm:$0xff] %v1130
    %1139 = vst [vmem:[#allocation22 + $0x18] sm:$0xff] %v1131
    %1140 = vst [vmem:[#allocation22 + $0x20] sm:$0xff] %v1132
    %1141 = vst [vmem:[#allocation22 + $0x28] sm:$0xff] %v1133
    %1142 = vst [vmem:[#allocation22 + $0x30] sm:$0xff] %v1134
    %1143 = vst [vmem:[#allocation22 + $0x38] sm:$0xff] %v1135
    // Predicated region
    $region102: #{tpu_custom_call.1} parent=1 // pred_check
      _
    $region103: #{tpu_custom_call.1} parent=1 // pred_check_branch
      %1145 = sbr.rel (0) target = $region105
    $region104: #{tpu_custom_call.1} parent=1 // pred_region
      %1147 = vsyncadd [#allocation7], 0
      %s1148 = sshll.u32 [#allocation22], 4
      %s1149 = int_to_ptr.vmem [resolvable:$true] %s1148
      %s1150 = sshll.u32 %s15, 4
      %s1151 = int_to_ptr.hbm [resolvable:$true] %s1150
      %1156 = dma.vmem_to_hbm [thread:$0]  %s1149, 1024, %s1151, [#allocation7], 128, 128, 8
    $region105: #{tpu_custom_call.1} parent=1 // pred_fallthru
      _
    // Predicated region
    $region106: #{tpu_custom_call.1} parent=1 // pred_check
      _
    $region107: #{tpu_custom_call.1} parent=1 // pred_check_branch
      %1158 = sbr.rel (0) target = $region109
    $region108: #{tpu_custom_call.1} parent=1 // pred_region
      %1160 = vsyncadd [#allocation24], 0
      %s1162 = sshll.u32 [#allocation23], 4
      %s1163 = int_to_ptr.vmem [resolvable:$true] %s1162
      %s1164 = sshll.u32 %s16, 4
      %s1165 = int_to_ptr.hbm [resolvable:$true] %s1164
      %1167 = dma.vmem_to_hbm [thread:$0]  %s1163, 128, %s1165, [#allocation24]
    $region109: #{tpu_custom_call.1} parent=1 // pred_fallthru
      _
    // Predicated region
    $region110: #{tpu_custom_call.1} parent=1 // pred_check
      _
    $region111: #{tpu_custom_call.1} parent=1 // pred_check_branch
      %1169 = sbr.rel (0) target = $region113
    $region112: #{tpu_custom_call.1} parent=1 // pred_region
      %1171 = vsyncadd [#allocation24], 0
      %s1173 = sshll.u32 [#allocation25], 4
      %s1174 = int_to_ptr.vmem [resolvable:$true] %s1173
      %s1175 = sshll.u32 %s17, 4
      %s1176 = int_to_ptr.hbm [resolvable:$true] %s1175
      %1178 = dma.vmem_to_hbm [thread:$0]  %s1174, 128, %s1176, [#allocation24]
    $region113: #{tpu_custom_call.1} parent=1 // pred_fallthru
      _
    // Predicated region
    $region114: #{tpu_custom_call.1} parent=1 // pred_check
      _
    $region115: #{tpu_custom_call.1} parent=1 // pred_check_branch
      %1180 = sbr.rel (0) target = $region117
    $region116: #{tpu_custom_call.1} parent=1 // pred_region
      %1182 = dma.done [#allocation7], 1024
    $region117: #{tpu_custom_call.1} parent=1 // pred_fallthru
      _
    // Predicated region
    $region118: #{tpu_custom_call.1} parent=1 // pred_check
      _
    $region119: #{tpu_custom_call.1} parent=1 // pred_check_branch
      %1184 = sbr.rel (0) target = $region121
    $region120: #{tpu_custom_call.1} parent=1 // pred_region
      %1186 = dma.done [#allocation24], 128
    $region121: #{tpu_custom_call.1} parent=1 // pred_fallthru
      _
    // Predicated region
    $region122: #{tpu_custom_call.1} parent=1 // pred_check
      _
    $region123: #{tpu_custom_call.1} parent=1 // pred_check_branch
      %1188 = sbr.rel (0) target = $region125
    $region124: #{tpu_custom_call.1} parent=1 // pred_region
      %1190 = dma.done [#allocation24], 128
    $region125: #{tpu_custom_call.1} parent=1 // pred_fallthru
      _
    %1191 = vsyncpa [#allocation6], 1
    %1192 = vsyncpa [#allocation9], 1
    %1193 = vsyncpa [#allocation12], 1
    %1194 = vsyncpa [#allocation15], 1
    %1195 = vsyncpa [#allocation18], 1
    %1196 = vsyncpa [#allocation21], 1
    %1197 = vsyncpa [#allocation7], 1
    %1198 = vsyncpa [#allocation24], 1

</llo_original>
